<compile_context>
chip_gen: v5e
topology: v5e:2x2
jax: 0.10.0
libtpu: 0.0.40
codegen_flags: <defaults>
</compile_context>

<pallas_src>
import jax
import jax.numpy as jnp
from jax.experimental import pallas as pl
from jax.experimental.pallas import tpu as pltpu

_LANE = 128
_TANH_LAYERS = (0, 1, 3, 4)  # Linear layers followed by Tanh (0-indexed of 6)


def _round_up(x, m):
    return (x + m - 1) // m * m


def _cdiv(a, b):
    return -(-a // b)


def _device_kind():
    try:
        return jax.devices()[0].device_kind.lower()
    except Exception:
        return ""


# --------------------------------------------------------------------------
# Kernel
# --------------------------------------------------------------------------
def _make_dae_kernel(tanh_in_bf16):
    """Builds the fused encoder->decoder kernel.

    Activations/weights enter the MXU as bf16 with f32 accumulation; bias-add
    runs in f32; tanh runs in bf16 on chips with a bf16 EUP (v6e/v7x), else f32.
    """

    def kernel(x_ref,
               w1_ref, b1_ref, w2_ref, b2_ref, w3_ref, b3_ref,
               w4_ref, b4_ref, w5_ref, b5_ref, w6_ref, b6_ref,
               out_ref):

        def layer(h, w_ref, b_ref, *, tanh, last=False):
            y = jnp.dot(h, w_ref[...], preferred_element_type=jnp.float32)
            y = y + b_ref[...]                 # f32 bias broadcasts over rows
            if tanh:
                if tanh_in_bf16:
                    return jnp.tanh(y.astype(jnp.bfloat16))
                return jnp.tanh(y).astype(jnp.bfloat16)
            if last:
                return y                       # keep f32 for the final store
            return y.astype(jnp.bfloat16)

        h = layer(x_ref[...], w1_ref, b1_ref, tanh=True)
        h = layer(h, w2_ref, b2_ref, tanh=True)
        z = layer(h, w3_ref, b3_ref, tanh=False)          # latent code
        h = layer(z, w4_ref, b4_ref, tanh=True)
        h = layer(h, w5_ref, b5_ref, tanh=True)
        y = layer(h, w6_ref, b6_ref, tanh=False, last=True)
        out_ref[...] = y.astype(out_ref.dtype)

    return kernel


# --------------------------------------------------------------------------
# One-time parameter preparation (hoisted out of the forward pass)
# --------------------------------------------------------------------------
def prepare_params(params):
    """Pad every weight/bias to lane multiples (128) and cast weights to bf16.

    Call ONCE (outside the training/inference step); the forward pass then
    consumes the prepared list directly, keeping the per-call graph lean.
    Returns (flat_params, meta).
    """
    flat = []
    for (w, b) in params:
        din, dout = w.shape
        din_p, dout_p = _round_up(din, _LANE), _round_up(dout, _LANE)
        wp = jnp.zeros((din_p, dout_p), jnp.bfloat16)
        wp = wp.at[:din, :dout].set(w.astype(jnp.bfloat16))
        bp = jnp.zeros((1, dout_p), jnp.float32)
        bp = bp.at[:, :dout].set(b.reshape(1, -1).astype(jnp.float32))
        flat.extend([wp, bp])
    meta = {
        "in_dim": params[0][0].shape[0],
        "out_dim": params[-1][0].shape[1],
        "in_pad": flat[0].shape[0],
        "out_pad": flat[-2].shape[1],
    }
    return flat, meta


# --------------------------------------------------------------------------
# Tiling policy (generation-aware)
# --------------------------------------------------------------------------
def _choose_tiling(batch, batch_tile, kind):
    b128 = _round_up(max(batch, 1), _LANE)
    # v5e (and older) default scoped VMEM is 16 MiB: cap the tile at 1024 there.
    tile_cap = 2048 if ("v6" in kind or "v7" in kind) else 1024
    tile_max = max(_LANE, min(batch_tile, tile_cap, b128))
    n_steps = _cdiv(b128, tile_max)
    # Multi-TensorCore chips: make sure the "parallel" grid axis has >= 2 steps
    # so both cores get work (when the batch is big enough to split).
    if any(t in kind for t in ("v7", "v5p", "v4")) and b128 >= 2 * _LANE:
        n_steps = max(n_steps, 2)
    tile = _round_up(_cdiv(b128, n_steps), _LANE)   # balanced tiles, min padding
    b_pad = tile * n_steps
    return tile, b_pad


# --------------------------------------------------------------------------
# Forward pass
# --------------------------------------------------------------------------
def dae_forward_padded(x_padded, flat_params, *, tile,
                       out_dtype=jnp.bfloat16, tanh_in_bf16=True):
    """Core fused forward on already-padded bf16 input.

    x_padded: (B_pad, in_pad) bf16, B_pad % tile == 0, in_pad % 128 == 0.
    Returns (B_pad, out_pad) in out_dtype.  Rows >= the true batch size carry
    garbage (bias propagated through tanh) — slice or mask them downstream.
    This is the production entry point: keeping data in the padded layout
    across calls avoids the pad/slice HBM round-trips of dae_forward().
    """
    b_pad, in_pad = x_padded.shape
    out_pad = flat_params[-2].shape[1]
    assert b_pad % tile == 0 and in_pad % _LANE == 0

    def full_spec(arr):
        # Whole (small) parameter array resident in VMEM; constant index map so
        # Pallas does not re-DMA it across grid steps (~0.6 MiB total).
        return pl.BlockSpec(arr.shape, lambda i: (0, 0))

    in_specs = [pl.BlockSpec((tile, in_pad), lambda i: (i, 0))]
    in_specs += [full_spec(p) for p in flat_params]
    out_specs = pl.BlockSpec((tile, out_pad), lambda i: (i, 0))

    fn = pl.pallas_call(
        _make_dae_kernel(tanh_in_bf16),
        out_shape=jax.ShapeDtypeStruct((b_pad, out_pad), out_dtype),
        grid_spec=pltpu.PrefetchScalarGridSpec(
            num_scalar_prefetch=0,
            grid=(b_pad // tile,),
            in_specs=in_specs,
            out_specs=out_specs,
        ),
        compiler_params=pltpu.CompilerParams(
            dimension_semantics=("parallel",)),
    )
    return fn(x_padded, *flat_params)


def dae_forward(x, prepared, *, batch_tile=1024, out_dtype=jnp.bfloat16):
    """Convenience wrapper: pads the input, runs the fused kernel, un-pads.

    Note: the pad-in / slice-out copies cost extra HBM traffic; for repeated
    calls keep data in the padded layout and use dae_forward_padded() directly.

    x:        (B, input_dim) float32 (or bf16)
    prepared: output of prepare_params(params)
    returns   (B, input_dim) in out_dtype (bf16 by default; pass jnp.float32
              for the module's original output dtype).
    """
    flat_params, meta = prepared
    B, in_dim = x.shape
    assert in_dim == meta["in_dim"]
    assert batch_tile % _LANE == 0, "batch_tile must be a multiple of 128"

    kind = _device_kind()
    tile, b_pad = _choose_tiling(B, batch_tile, kind)
    tanh_in_bf16 = not any(t in kind for t in ("v2", "v3", "v4", "v5"))

    x_p = jnp.zeros((b_pad, meta["in_pad"]), jnp.bfloat16)
    x_p = x_p.at[:B, :in_dim].set(x.astype(jnp.bfloat16))

    out = dae_forward_padded(x_p, flat_params, tile=tile,
                             out_dtype=out_dtype, tanh_in_bf16=tanh_in_bf16)
    return out[:B, :meta["out_dim"]]


# --------------------------------------------------------------------------
# Parameters and references
# --------------------------------------------------------------------------
def init_dae_params(key, input_dim=376, target_dim=64):
    """Deterministic synthetic parameter init (not a checkpoint load)."""
    dims = [
        (input_dim, 256), (256, 128), (128, target_dim),   # encoder
        (target_dim, 128), (128, 256), (256, input_dim),   # decoder
    ]
    params = []
    for (din, dout) in dims:
        key, kw, kb = jax.random.split(key, 3)
        scale = 1.0 / jnp.sqrt(jnp.float32(din))
        w = jax.random.uniform(kw, (din, dout), jnp.float32, -scale, scale)
        b = jax.random.uniform(kb, (1, dout), jnp.float32, -scale, scale)
        params.append((w, b))
    return params


def dae_reference_f32(x, params):
    """Pure-JAX f32 reference matching the PyTorch forward semantics exactly."""
    h = x
    for i, (w, b) in enumerate(params):
        h = h @ w + b
        if i in _TANH_LAYERS:
            h = jnp.tanh(h)
    return h


def dae_reference_bf16(x, params):
    """Reference using the same bf16-input / f32-accumulate recipe as the kernel."""
    h = x.astype(jnp.bfloat16)
    for i, (w, b) in enumerate(params):
        y = jnp.dot(h, w.astype(jnp.bfloat16), preferred_element_type=jnp.float32)
        y = y + b.astype(jnp.float32)
        if i in _TANH_LAYERS:
            y = jnp.tanh(y)
        h = y.astype(jnp.bfloat16) if i < len(params) - 1 else y
    return h


if __name__ == "__main__":
    key = jax.random.PRNGKey(0)
    key, kx = jax.random.split(key)

    input_dim = 376   # module default
    target_dim = 64   # module default
    batch = 8         # small demo batch; wrapper pads it to one full tile

    x = jax.random.normal(kx, (batch, input_dim), jnp.float32)
    params = init_dae_params(key, input_dim=input_dim, target_dim=target_dim)

    prepared = prepare_params(params)                 # one-time prep
    out = jax.block_until_ready(dae_forward(x, prepared))

    assert out.shape == (batch, input_dim)
    assert out.dtype == jnp.bfloat16                  # default low-HBM output

    out32 = out.astype(jnp.float32)
    ref_bf16 = dae_reference_bf16(x, params)          # same precision recipe
    ref_f32 = dae_reference_f32(x, params)            # exact module semantics
    assert jnp.allclose(out32, ref_bf16, atol=3e-2, rtol=3e-2), \
        "mismatch vs bf16 reference"
    assert jnp.allclose(out32, ref_f32, atol=1.5e-1, rtol=1.5e-1), \
        "mismatch vs f32 reference"

    print("KERNEL_OK")
</pallas_src>

<mosaic_0001>
module attributes {stable_mosaic.version = 11 : i64} {
  func.func @kernel(%arg0: i32, %arg1: memref<128x384xbf16, #tpu.memory_space<vmem>>, %arg2: memref<384x256xbf16, #tpu.memory_space<vmem>>, %arg3: memref<1x256xf32, #tpu.memory_space<vmem>>, %arg4: memref<256x128xbf16, #tpu.memory_space<vmem>>, %arg5: memref<1x128xf32, #tpu.memory_space<vmem>>, %arg6: memref<128x128xbf16, #tpu.memory_space<vmem>>, %arg7: memref<1x128xf32, #tpu.memory_space<vmem>>, %arg8: memref<128x128xbf16, #tpu.memory_space<vmem>>, %arg9: memref<1x128xf32, #tpu.memory_space<vmem>>, %arg10: memref<128x256xbf16, #tpu.memory_space<vmem>>, %arg11: memref<1x256xf32, #tpu.memory_space<vmem>>, %arg12: memref<256x384xbf16, #tpu.memory_space<vmem>>, %arg13: memref<1x384xf32, #tpu.memory_space<vmem>>, %arg14: memref<128x384xbf16, #tpu.memory_space<vmem>>) attributes {dimension_semantics = [#tpu.dimension_semantics<parallel>], iteration_bounds = array<i64: 1>, scalar_prefetch = 0 : i64, scratch_operands = 0 : i64, tpu.core_type = #tpu.core_type<tc>, window_params = [{transform_indices = @transform_0, window_bounds = array<i64: 128, 384>}, {pipeline_mode = #tpu.pipeline_mode<synchronous>, transform_indices = @transform_1, window_bounds = array<i64: 384, 256>}, {pipeline_mode = #tpu.pipeline_mode<synchronous>, transform_indices = @transform_2, window_bounds = array<i64: 1, 256>}, {pipeline_mode = #tpu.pipeline_mode<synchronous>, transform_indices = @transform_3, window_bounds = array<i64: 256, 128>}, {pipeline_mode = #tpu.pipeline_mode<synchronous>, transform_indices = @transform_4, window_bounds = array<i64: 1, 128>}, {pipeline_mode = #tpu.pipeline_mode<synchronous>, transform_indices = @transform_5, window_bounds = array<i64: 128, 128>}, {pipeline_mode = #tpu.pipeline_mode<synchronous>, transform_indices = @transform_6, window_bounds = array<i64: 1, 128>}, {pipeline_mode = #tpu.pipeline_mode<synchronous>, transform_indices = @transform_7, window_bounds = array<i64: 128, 128>}, {pipeline_mode = #tpu.pipeline_mode<synchronous>, transform_indices = @transform_8, window_bounds = array<i64: 1, 128>}, {pipeline_mode = #tpu.pipeline_mode<synchronous>, transform_indices = @transform_9, window_bounds = array<i64: 128, 256>}, {pipeline_mode = #tpu.pipeline_mode<synchronous>, transform_indices = @transform_10, window_bounds = array<i64: 1, 256>}, {pipeline_mode = #tpu.pipeline_mode<synchronous>, transform_indices = @transform_11, window_bounds = array<i64: 256, 384>}, {pipeline_mode = #tpu.pipeline_mode<synchronous>, transform_indices = @transform_12, window_bounds = array<i64: 1, 384>}, {transform_indices = @transform_13, window_bounds = array<i64: 128, 384>}]} {
    %c0 = arith.constant 0 : index
    %c0_0 = arith.constant 0 : index
    %0 = vector.load %arg1[%c0, %c0_0] : memref<128x384xbf16, #tpu.memory_space<vmem>>, vector<128x384xbf16>
    %c0_1 = arith.constant 0 : index
    %c0_2 = arith.constant 0 : index
    %1 = vector.load %arg2[%c0_1, %c0_2] : memref<384x256xbf16, #tpu.memory_space<vmem>>, vector<384x256xbf16>
    %cst = arith.constant dense<0.000000e+00> : vector<128x256xf32>
    %2 = tpu.matmul %0, %1, %cst {dimension_numbers = #tpu.dot_dimension_numbers<[1], [0], [0], [1], [0, 0, 1, 1], [], []>} : vector<128x384xbf16>, vector<384x256xbf16>, vector<128x256xf32> -> vector<128x256xf32>
    %c0_3 = arith.constant 0 : index
    %c0_4 = arith.constant 0 : index
    %3 = vector.load %arg3[%c0_3, %c0_4] : memref<1x256xf32, #tpu.memory_space<vmem>>, vector<1x256xf32>
    %4 = vector.broadcast %3 : vector<1x256xf32> to vector<128x256xf32>
    %5 = arith.addf %2, %4 : vector<128x256xf32>
    %6 = arith.truncf %5 : vector<128x256xf32> to vector<128x256xbf16>
    %7 = math.tanh %6 : vector<128x256xbf16>
    %c0_5 = arith.constant 0 : index
    %c0_6 = arith.constant 0 : index
    %8 = vector.load %arg4[%c0_5, %c0_6] : memref<256x128xbf16, #tpu.memory_space<vmem>>, vector<256x128xbf16>
    %cst_7 = arith.constant dense<0.000000e+00> : vector<128x128xf32>
    %9 = tpu.matmul %7, %8, %cst_7 {dimension_numbers = #tpu.dot_dimension_numbers<[1], [0], [0], [1], [0, 0, 1, 1], [], []>} : vector<128x256xbf16>, vector<256x128xbf16>, vector<128x128xf32> -> vector<128x128xf32>
    %c0_8 = arith.constant 0 : index
    %c0_9 = arith.constant 0 : index
    %10 = vector.load %arg5[%c0_8, %c0_9] : memref<1x128xf32, #tpu.memory_space<vmem>>, vector<1x128xf32>
    %11 = vector.broadcast %10 : vector<1x128xf32> to vector<128x128xf32>
    %12 = arith.addf %9, %11 : vector<128x128xf32>
    %13 = arith.truncf %12 : vector<128x128xf32> to vector<128x128xbf16>
    %14 = math.tanh %13 : vector<128x128xbf16>
    %c0_10 = arith.constant 0 : index
    %c0_11 = arith.constant 0 : index
    %15 = vector.load %arg6[%c0_10, %c0_11] : memref<128x128xbf16, #tpu.memory_space<vmem>>, vector<128x128xbf16>
    %cst_12 = arith.constant dense<0.000000e+00> : vector<128x128xf32>
    %16 = tpu.matmul %14, %15, %cst_12 {dimension_numbers = #tpu.dot_dimension_numbers<[1], [0], [0], [1], [0, 0, 1, 1], [], []>} : vector<128x128xbf16>, vector<128x128xbf16>, vector<128x128xf32> -> vector<128x128xf32>
    %c0_13 = arith.constant 0 : index
    %c0_14 = arith.constant 0 : index
    %17 = vector.load %arg7[%c0_13, %c0_14] : memref<1x128xf32, #tpu.memory_space<vmem>>, vector<1x128xf32>
    %18 = vector.broadcast %17 : vector<1x128xf32> to vector<128x128xf32>
    %19 = arith.addf %16, %18 : vector<128x128xf32>
    %20 = arith.truncf %19 : vector<128x128xf32> to vector<128x128xbf16>
    %c0_15 = arith.constant 0 : index
    %c0_16 = arith.constant 0 : index
    %21 = vector.load %arg8[%c0_15, %c0_16] : memref<128x128xbf16, #tpu.memory_space<vmem>>, vector<128x128xbf16>
    %cst_17 = arith.constant dense<0.000000e+00> : vector<128x128xf32>
    %22 = tpu.matmul %20, %21, %cst_17 {dimension_numbers = #tpu.dot_dimension_numbers<[1], [0], [0], [1], [0, 0, 1, 1], [], []>} : vector<128x128xbf16>, vector<128x128xbf16>, vector<128x128xf32> -> vector<128x128xf32>
    %c0_18 = arith.constant 0 : index
    %c0_19 = arith.constant 0 : index
    %23 = vector.load %arg9[%c0_18, %c0_19] : memref<1x128xf32, #tpu.memory_space<vmem>>, vector<1x128xf32>
    %24 = vector.broadcast %23 : vector<1x128xf32> to vector<128x128xf32>
    %25 = arith.addf %22, %24 : vector<128x128xf32>
    %26 = arith.truncf %25 : vector<128x128xf32> to vector<128x128xbf16>
    %27 = math.tanh %26 : vector<128x128xbf16>
    %c0_20 = arith.constant 0 : index
    %c0_21 = arith.constant 0 : index
    %28 = vector.load %arg10[%c0_20, %c0_21] : memref<128x256xbf16, #tpu.memory_space<vmem>>, vector<128x256xbf16>
    %cst_22 = arith.constant dense<0.000000e+00> : vector<128x256xf32>
    %29 = tpu.matmul %27, %28, %cst_22 {dimension_numbers = #tpu.dot_dimension_numbers<[1], [0], [0], [1], [0, 0, 1, 1], [], []>} : vector<128x128xbf16>, vector<128x256xbf16>, vector<128x256xf32> -> vector<128x256xf32>
    %c0_23 = arith.constant 0 : index
    %c0_24 = arith.constant 0 : index
    %30 = vector.load %arg11[%c0_23, %c0_24] : memref<1x256xf32, #tpu.memory_space<vmem>>, vector<1x256xf32>
    %31 = vector.broadcast %30 : vector<1x256xf32> to vector<128x256xf32>
    %32 = arith.addf %29, %31 : vector<128x256xf32>
    %33 = arith.truncf %32 : vector<128x256xf32> to vector<128x256xbf16>
    %34 = math.tanh %33 : vector<128x256xbf16>
    %c0_25 = arith.constant 0 : index
    %c0_26 = arith.constant 0 : index
    %35 = vector.load %arg12[%c0_25, %c0_26] : memref<256x384xbf16, #tpu.memory_space<vmem>>, vector<256x384xbf16>
    %cst_27 = arith.constant dense<0.000000e+00> : vector<128x384xf32>
    %36 = tpu.matmul %34, %35, %cst_27 {dimension_numbers = #tpu.dot_dimension_numbers<[1], [0], [0], [1], [0, 0, 1, 1], [], []>} : vector<128x256xbf16>, vector<256x384xbf16>, vector<128x384xf32> -> vector<128x384xf32>
    %c0_28 = arith.constant 0 : index
    %c0_29 = arith.constant 0 : index
    %37 = vector.load %arg13[%c0_28, %c0_29] : memref<1x384xf32, #tpu.memory_space<vmem>>, vector<1x384xf32>
    %38 = vector.broadcast %37 : vector<1x384xf32> to vector<128x384xf32>
    %39 = arith.addf %36, %38 : vector<128x384xf32>
    %40 = arith.truncf %39 : vector<128x384xf32> to vector<128x384xbf16>
    %c0_30 = arith.constant 0 : index
    %c0_31 = arith.constant 0 : index
    %41 = vector.load %arg14[%c0_30, %c0_31] : memref<128x384xbf16, #tpu.memory_space<vmem>>, vector<128x384xbf16>
    tpu.vector_store %arg14[%c0_30, %c0_31], %40 {strides = array<i32>} : memref<128x384xbf16, #tpu.memory_space<vmem>>, vector<128x384xbf16>,
    return
  }
  func.func @transform_0(%arg0: i32) -> (i32, i32) {
    %c0_i32 = arith.constant 0 : i32
    %c0_i32_0 = arith.constant 0 : i32
    return %arg0, %c0_i32 : i32, i32
  }
  func.func @transform_1(%arg0: i32) -> (i32, i32) {
    %c0_i32 = arith.constant 0 : i32
    %c0_i32_0 = arith.constant 0 : i32
    %c0_i32_1 = arith.constant 0 : i32
    return %c0_i32, %c0_i32_0 : i32, i32
  }
  func.func @transform_2(%arg0: i32) -> (i32, i32) {
    %c0_i32 = arith.constant 0 : i32
    %c0_i32_0 = arith.constant 0 : i32
    %c0_i32_1 = arith.constant 0 : i32
    return %c0_i32, %c0_i32_0 : i32, i32
  }
  func.func @transform_3(%arg0: i32) -> (i32, i32) {
    %c0_i32 = arith.constant 0 : i32
    %c0_i32_0 = arith.constant 0 : i32
    %c0_i32_1 = arith.constant 0 : i32
    return %c0_i32, %c0_i32_0 : i32, i32
  }
  func.func @transform_4(%arg0: i32) -> (i32, i32) {
    %c0_i32 = arith.constant 0 : i32
    %c0_i32_0 = arith.constant 0 : i32
    %c0_i32_1 = arith.constant 0 : i32
    return %c0_i32, %c0_i32_0 : i32, i32
  }
  func.func @transform_5(%arg0: i32) -> (i32, i32) {
    %c0_i32 = arith.constant 0 : i32
    %c0_i32_0 = arith.constant 0 : i32
    %c0_i32_1 = arith.constant 0 : i32
    return %c0_i32, %c0_i32_0 : i32, i32
  }
  func.func @transform_6(%arg0: i32) -> (i32, i32) {
    %c0_i32 = arith.constant 0 : i32
    %c0_i32_0 = arith.constant 0 : i32
    %c0_i32_1 = arith.constant 0 : i32
    return %c0_i32, %c0_i32_0 : i32, i32
  }
  func.func @transform_7(%arg0: i32) -> (i32, i32) {
    %c0_i32 = arith.constant 0 : i32
    %c0_i32_0 = arith.constant 0 : i32
    %c0_i32_1 = arith.constant 0 : i32
    return %c0_i32, %c0_i32_0 : i32, i32
  }
  func.func @transform_8(%arg0: i32) -> (i32, i32) {
    %c0_i32 = arith.constant 0 : i32
    %c0_i32_0 = arith.constant 0 : i32
    %c0_i32_1 = arith.constant 0 : i32
    return %c0_i32, %c0_i32_0 : i32, i32
  }
  func.func @transform_9(%arg0: i32) -> (i32, i32) {
    %c0_i32 = arith.constant 0 : i32
    %c0_i32_0 = arith.constant 0 : i32
    %c0_i32_1 = arith.constant 0 : i32
    return %c0_i32, %c0_i32_0 : i32, i32
  }
  func.func @transform_10(%arg0: i32) -> (i32, i32) {
    %c0_i32 = arith.constant 0 : i32
    %c0_i32_0 = arith.constant 0 : i32
    %c0_i32_1 = arith.constant 0 : i32
    return %c0_i32, %c0_i32_0 : i32, i32
  }
  func.func @transform_11(%arg0: i32) -> (i32, i32) {
    %c0_i32 = arith.constant 0 : i32
    %c0_i32_0 = arith.constant 0 : i32
    %c0_i32_1 = arith.constant 0 : i32
    return %c0_i32, %c0_i32_0 : i32, i32
  }
  func.func @transform_12(%arg0: i32) -> (i32, i32) {
    %c0_i32 = arith.constant 0 : i32
    %c0_i32_0 = arith.constant 0 : i32
    %c0_i32_1 = arith.constant 0 : i32
    return %c0_i32, %c0_i32_0 : i32, i32
  }
  func.func @transform_13(%arg0: i32) -> (i32, i32) {
    %c0_i32 = arith.constant 0 : i32
    %c0_i32_0 = arith.constant 0 : i32
    return %arg0, %c0_i32 : i32, i32
  }
}

</mosaic_0001>

<llo_original>
// kernel: tpu_custom_call.1
$region0: #{tpu_custom_call.1}
  #allocation0 [shape = 'u32[]', space=smem, size = 0x4, offset = 0x4, fixed_abs, tag = 'smem constant byte address 0x4 - core index']
  #allocation1 [shape = 'u32[72,128]{1,0:T(1,128)}', space=vmem, size = 0x9000, scoped, tag = 'internal scratch']
  %s0 = inlined_call_operand.hbm [shape: bf16[128,384], index: 0, kind: input, shape index: {}]
  %s1 = inlined_call_operand.hbm [shape: bf16[384,256], index: 1, kind: input, shape index: {}]
  %s2 = inlined_call_operand.hbm [shape: f32[1,256], index: 2, kind: input, shape index: {}]
  %s3 = inlined_call_operand.hbm [shape: bf16[256,128], index: 3, kind: input, shape index: {}]
  %s4 = inlined_call_operand.hbm [shape: f32[1,128], index: 4, kind: input, shape index: {}]
  %s5 = inlined_call_operand.hbm [shape: bf16[128,128], index: 5, kind: input, shape index: {}]
  %s6 = inlined_call_operand.hbm [shape: f32[1,128], index: 6, kind: input, shape index: {}]
  %s7 = inlined_call_operand.hbm [shape: bf16[128,128], index: 7, kind: input, shape index: {}]
  %s8 = inlined_call_operand.vmem [shape: f32[1,128], index: 8, kind: input, shape index: {}]
  %s9 = inlined_call_operand.hbm [shape: bf16[128,256], index: 9, kind: input, shape index: {}]
  %s10 = inlined_call_operand.vmem [shape: f32[1,256], index: 10, kind: input, shape index: {}]
  %s11 = inlined_call_operand.hbm [shape: bf16[256,384], index: 11, kind: input, shape index: {}]
  %s12 = inlined_call_operand.vmem [shape: f32[1,384], index: 12, kind: input, shape index: {}]
  %s13 = inlined_call_operand.hbm [shape: bf16[128,384], index: 13, kind: output, shape index: {}]
  %s14 = sld [smem:[#allocation0]]
  $region102: #{tpu_custom_call.1} parent=0
    _
  %s16 = ssub.s32 1, %s14
  %s17 = scalar_select 0, %s16, %s14
  $region1: #{tpu_custom_call.1} parent=0
    #allocation2 [shape = 'u8[98304]{0}', space=vmem, size = 0x18000, scoped, tag = 'input window, operand 0, single buffered']
    #allocation3 [shape = 's32[1]{0}', space=sflag, size = 0x4, scoped, tag = 'scoped memory for tpu_custom_call.1']
    #allocation4 [shape = 's32[1]{0}', space=sflag, size = 0x4, scoped, tag = 'scoped memory for tpu_custom_call.1']
    #allocation5 [shape = 'u8[196608]{0}', space=vmem, size = 0x30000, scoped, tag = 'input window, operand 1, single buffered']
    #allocation6 [shape = 's32[1]{0}', space=sflag, size = 0x4, scoped, tag = 'scoped memory for tpu_custom_call.1']
    #allocation7 [shape = 'u8[1024]{0}', space=vmem, size = 0x400, scoped, tag = 'input window, operand 2, single buffered']
    #allocation8 [shape = 'u8[65536]{0}', space=vmem, size = 0x10000, scoped, tag = 'input window, operand 3, single buffered']
    #allocation9 [shape = 's32[1]{0}', space=sflag, size = 0x4, scoped, tag = 'scoped memory for tpu_custom_call.1']
    #allocation10 [shape = 'u8[512]{0}', space=vmem, size = 0x400, scoped, tag = 'input window, operand 4, single buffered']
    #allocation11 [shape = 'u8[32768]{0}', space=vmem, size = 0x8000, scoped, tag = 'input window, operand 5, single buffered']
    #allocation12 [shape = 's32[1]{0}', space=sflag, size = 0x4, scoped, tag = 'scoped memory for tpu_custom_call.1']
    #allocation13 [shape = 'u8[512]{0}', space=vmem, size = 0x400, scoped, tag = 'input window, operand 6, single buffered']
    #allocation14 [shape = 'u8[32768]{0}', space=vmem, size = 0x8000, scoped, tag = 'input window, operand 7, single buffered']
    #allocation15 [shape = 's32[1]{0}', space=sflag, size = 0x4, scoped, tag = 'scoped memory for tpu_custom_call.1']
    #allocation16 [shape = 'u8[65536]{0}', space=vmem, size = 0x10000, scoped, tag = 'input window, operand 9, single buffered']
    #allocation17 [shape = 'u8[196608]{0}', space=vmem, size = 0x30000, scoped, tag = 'input window, operand 11, single buffered']
    #allocation18 [shape = 's32[1]{0}', space=sflag, size = 0x4, scoped, tag = 'scoped memory for tpu_custom_call.1']
    #allocation19 [shape = 'u8[98304]{0}', space=vmem, size = 0x18000, scoped, tag = 'output window, operand 0, single buffered']
    %18 = vsyncpa [#allocation3], 0
    %19 = vsyncpa [#allocation6], 0
    %20 = vsyncpa [#allocation9], 0
    %21 = vsyncpa [#allocation12], 0
    %22 = vsyncpa [#allocation15], 0
    %23 = vsyncpa [#allocation18], 0
    %24 = vsyncpa [#allocation4], 0
    // Predicated region
    $region2: #{tpu_custom_call.1} parent=1 // pred_check
      _
    $region3: #{tpu_custom_call.1} parent=1 // pred_check_branch
      %26 = sbr.rel (0) target = $region5
    $region4: #{tpu_custom_call.1} parent=1 // pred_region
      %28 = vsyncadd [#allocation3], 0
      %s29 = sshll.u32 %s0, 4
      %s30 = int_to_ptr.hbm [resolvable:$true] %s29
      %s31 = sshll.u32 [#allocation2], 4
      %s32 = int_to_ptr.vmem [resolvable:$true] %s31
      %37 = dma.hbm_to_vmem [thread:$0]  %s30, 3072, %s32, [#allocation3], 192, 192, 12
    $region5: #{tpu_custom_call.1} parent=1 // pred_fallthru
      _
    // Predicated region
    $region6: #{tpu_custom_call.1} parent=1 // pred_check
      _
    $region7: #{tpu_custom_call.1} parent=1 // pred_check_branch
      %39 = sbr.rel (0) target = $region9
    $region8: #{tpu_custom_call.1} parent=1 // pred_region
      %41 = vsyncadd [#allocation6], 0
      %s42 = sshll.u32 %s1, 4
      %s43 = int_to_ptr.hbm [resolvable:$true] %s42
      %s44 = sshll.u32 [#allocation5], 4
      %s45 = int_to_ptr.vmem [resolvable:$true] %s44
      %50 = dma.hbm_to_vmem [thread:$0]  %s43, 6144, %s45, [#allocation6], 128, 128, 8
    $region9: #{tpu_custom_call.1} parent=1 // pred_fallthru
      _
    // Predicated region
    $region10: #{tpu_custom_call.1} parent=1 // pred_check
      _
    $region11: #{tpu_custom_call.1} parent=1 // pred_check_branch
      %52 = sbr.rel (0) target = $region13
    $region12: #{tpu_custom_call.1} parent=1 // pred_region
      %54 = vsyncadd [#allocation6], 0
      %s56 = sshll.u32 %s2, 4
      %s57 = int_to_ptr.hbm [resolvable:$true] %s56
      %s58 = sshll.u32 [#allocation7], 4
      %s59 = int_to_ptr.vmem [resolvable:$true] %s58
      %61 = dma.hbm_to_vmem [thread:$0]  %s57, 32, %s59, [#allocation6]
    $region13: #{tpu_custom_call.1} parent=1 // pred_fallthru
      _
    // Predicated region
    $region14: #{tpu_custom_call.1} parent=1 // pred_check
      _
    $region15: #{tpu_custom_call.1} parent=1 // pred_check_branch
      %63 = sbr.rel (0) target = $region17
    $region16: #{tpu_custom_call.1} parent=1 // pred_region
      %65 = vsyncadd [#allocation9], 0
      %s66 = sshll.u32 %s3, 4
      %s67 = int_to_ptr.hbm [resolvable:$true] %s66
      %s68 = sshll.u32 [#allocation8], 4
      %s69 = int_to_ptr.vmem [resolvable:$true] %s68
      %74 = dma.hbm_to_vmem [thread:$0]  %s67, 2048, %s69, [#allocation9], 64, 64, 4
    $region17: #{tpu_custom_call.1} parent=1 // pred_fallthru
      _
    // Predicated region
    $region18: #{tpu_custom_call.1} parent=1 // pred_check
      _
    $region19: #{tpu_custom_call.1} parent=1 // pred_check_branch
      %76 = sbr.rel (0) target = $region21
    $region20: #{tpu_custom_call.1} parent=1 // pred_region
      %78 = vsyncadd [#allocation9], 0
      %s80 = sshll.u32 %s4, 4
      %s81 = int_to_ptr.hbm [resolvable:$true] %s80
      %s82 = sshll.u32 [#allocation10], 4
      %s83 = int_to_ptr.vmem [resolvable:$true] %s82
      %85 = dma.hbm_to_vmem [thread:$0]  %s81, 16, %s83, [#allocation9]
    $region21: #{tpu_custom_call.1} parent=1 // pred_fallthru
      _
    // Predicated region
    $region22: #{tpu_custom_call.1} parent=1 // pred_check
      _
    $region23: #{tpu_custom_call.1} parent=1 // pred_check_branch
      %87 = sbr.rel (0) target = $region25
    $region24: #{tpu_custom_call.1} parent=1 // pred_region
      %89 = vsyncadd [#allocation12], 0
      %s90 = sshll.u32 %s5, 4
      %s91 = int_to_ptr.hbm [resolvable:$true] %s90
      %s92 = sshll.u32 [#allocation11], 4
      %s93 = int_to_ptr.vmem [resolvable:$true] %s92
      %98 = dma.hbm_to_vmem [thread:$0]  %s91, 1024, %s93, [#allocation12], 64, 64, 4
    $region25: #{tpu_custom_call.1} parent=1 // pred_fallthru
      _
    // Predicated region
    $region26: #{tpu_custom_call.1} parent=1 // pred_check
      _
    $region27: #{tpu_custom_call.1} parent=1 // pred_check_branch
      %100 = sbr.rel (0) target = $region29
    $region28: #{tpu_custom_call.1} parent=1 // pred_region
      %102 = vsyncadd [#allocation12], 0
      %s104 = sshll.u32 %s6, 4
      %s105 = int_to_ptr.hbm [resolvable:$true] %s104
      %s106 = sshll.u32 [#allocation13], 4
      %s107 = int_to_ptr.vmem [resolvable:$true] %s106
      %109 = dma.hbm_to_vmem [thread:$0]  %s105, 16, %s107, [#allocation12]
    $region29: #{tpu_custom_call.1} parent=1 // pred_fallthru
      _
    // Predicated region
    $region30: #{tpu_custom_call.1} parent=1 // pred_check
      _
    $region31: #{tpu_custom_call.1} parent=1 // pred_check_branch
      %111 = sbr.rel (0) target = $region33
    $region32: #{tpu_custom_call.1} parent=1 // pred_region
      %113 = vsyncadd [#allocation15], 0
      %s114 = sshll.u32 %s7, 4
      %s115 = int_to_ptr.hbm [resolvable:$true] %s114
      %s116 = sshll.u32 [#allocation14], 4
      %s117 = int_to_ptr.vmem [resolvable:$true] %s116
      %122 = dma.hbm_to_vmem [thread:$0]  %s115, 1024, %s117, [#allocation15], 64, 64, 4
    $region33: #{tpu_custom_call.1} parent=1 // pred_fallthru
      _
    // Predicated region
    $region34: #{tpu_custom_call.1} parent=1 // pred_check
      _
    $region35: #{tpu_custom_call.1} parent=1 // pred_check_branch
      %124 = sbr.rel (0) target = $region37
    $region36: #{tpu_custom_call.1} parent=1 // pred_region
      _
    $region37: #{tpu_custom_call.1} parent=1 // pred_fallthru
      _
    // Predicated region
    $region38: #{tpu_custom_call.1} parent=1 // pred_check
      _
    $region39: #{tpu_custom_call.1} parent=1 // pred_check_branch
      %126 = sbr.rel (0) target = $region41
    $region40: #{tpu_custom_call.1} parent=1 // pred_region
      %128 = vsyncadd [#allocation15], 0
      %s129 = sshll.u32 %s9, 4
      %s130 = int_to_ptr.hbm [resolvable:$true] %s129
      %s131 = sshll.u32 [#allocation16], 4
      %s132 = int_to_ptr.vmem [resolvable:$true] %s131
      %137 = dma.hbm_to_vmem [thread:$0]  %s130, 2048, %s132, [#allocation15], 128, 128, 8
    $region41: #{tpu_custom_call.1} parent=1 // pred_fallthru
      _
    // Predicated region
    $region42: #{tpu_custom_call.1} parent=1 // pred_check
      _
    $region43: #{tpu_custom_call.1} parent=1 // pred_check_branch
      %139 = sbr.rel (0) target = $region45
    $region44: #{tpu_custom_call.1} parent=1 // pred_region
      _
    $region45: #{tpu_custom_call.1} parent=1 // pred_fallthru
      _
    // Predicated region
    $region46: #{tpu_custom_call.1} parent=1 // pred_check
      _
    $region47: #{tpu_custom_call.1} parent=1 // pred_check_branch
      %141 = sbr.rel (0) target = $region49
    $region48: #{tpu_custom_call.1} parent=1 // pred_region
      %143 = vsyncadd [#allocation18], 0
      %s144 = sshll.u32 %s11, 4
      %s145 = int_to_ptr.hbm [resolvable:$true] %s144
      %s146 = sshll.u32 [#allocation17], 4
      %s147 = int_to_ptr.vmem [resolvable:$true] %s146
      %152 = dma.hbm_to_vmem [thread:$0]  %s145, 6144, %s147, [#allocation18], 192, 192, 12
    $region49: #{tpu_custom_call.1} parent=1 // pred_fallthru
      _
    // Predicated region
    $region50: #{tpu_custom_call.1} parent=1 // pred_check
      _
    $region51: #{tpu_custom_call.1} parent=1 // pred_check_branch
      %154 = sbr.rel (0) target = $region53
    $region52: #{tpu_custom_call.1} parent=1 // pred_region
      _
    $region53: #{tpu_custom_call.1} parent=1 // pred_fallthru
      _
    // Predicated region
    $region54: #{tpu_custom_call.1} parent=1 // pred_check
      _
    $region55: #{tpu_custom_call.1} parent=1 // pred_check_branch
      %156 = sbr.rel (0) target = $region57
    $region56: #{tpu_custom_call.1} parent=1 // pred_region
      %158 = dma.done [#allocation3], 3072
    $region57: #{tpu_custom_call.1} parent=1 // pred_fallthru
      _
    // Predicated region
    $region58: #{tpu_custom_call.1} parent=1 // pred_check
      _
    $region59: #{tpu_custom_call.1} parent=1 // pred_check_branch
      %160 = sbr.rel (0) target = $region61
    $region60: #{tpu_custom_call.1} parent=1 // pred_region
      %162 = dma.done [#allocation6], 6144
    $region61: #{tpu_custom_call.1} parent=1 // pred_fallthru
      _
    // Predicated region
    $region62: #{tpu_custom_call.1} parent=1 // pred_check
      _
    $region63: #{tpu_custom_call.1} parent=1 // pred_check_branch
      %164 = sbr.rel (0) target = $region65
    $region64: #{tpu_custom_call.1} parent=1 // pred_region
      %166 = dma.done [#allocation6], 32
    $region65: #{tpu_custom_call.1} parent=1 // pred_fallthru
      _
    // Predicated region
    $region66: #{tpu_custom_call.1} parent=1 // pred_check
      _
    $region67: #{tpu_custom_call.1} parent=1 // pred_check_branch
      %168 = sbr.rel (0) target = $region69
    $region68: #{tpu_custom_call.1} parent=1 // pred_region
      %170 = dma.done [#allocation9], 2048
    $region69: #{tpu_custom_call.1} parent=1 // pred_fallthru
      _
    // Predicated region
    $region70: #{tpu_custom_call.1} parent=1 // pred_check
      _
    $region71: #{tpu_custom_call.1} parent=1 // pred_check_branch
      %172 = sbr.rel (0) target = $region73
    $region72: #{tpu_custom_call.1} parent=1 // pred_region
      %174 = dma.done [#allocation9], 16
    $region73: #{tpu_custom_call.1} parent=1 // pred_fallthru
      _
    // Predicated region
    $region74: #{tpu_custom_call.1} parent=1 // pred_check
      _
    $region75: #{tpu_custom_call.1} parent=1 // pred_check_branch
      %176 = sbr.rel (0) target = $region77
    $region76: #{tpu_custom_call.1} parent=1 // pred_region
      %178 = dma.done [#allocation12], 1024
    $region77: #{tpu_custom_call.1} parent=1 // pred_fallthru
      _
    // Predicated region
    $region78: #{tpu_custom_call.1} parent=1 // pred_check
      _
    $region79: #{tpu_custom_call.1} parent=1 // pred_check_branch
      %180 = sbr.rel (0) target = $region81
    $region80: #{tpu_custom_call.1} parent=1 // pred_region
      %182 = dma.done [#allocation12], 16
    $region81: #{tpu_custom_call.1} parent=1 // pred_fallthru
      _
    // Predicated region
    $region82: #{tpu_custom_call.1} parent=1 // pred_check
      _
    $region83: #{tpu_custom_call.1} parent=1 // pred_check_branch
      %184 = sbr.rel (0) target = $region85
    $region84: #{tpu_custom_call.1} parent=1 // pred_region
      %186 = dma.done [#allocation15], 1024
    $region85: #{tpu_custom_call.1} parent=1 // pred_fallthru
      _
    // Predicated region
    $region86: #{tpu_custom_call.1} parent=1 // pred_check
      _
    $region87: #{tpu_custom_call.1} parent=1 // pred_check_branch
      %188 = sbr.rel (0) target = $region89
    $region88: #{tpu_custom_call.1} parent=1 // pred_region
      %190 = dma.done [#allocation15], 2048
    $region89: #{tpu_custom_call.1} parent=1 // pred_fallthru
      _
    // Predicated region
    $region90: #{tpu_custom_call.1} parent=1 // pred_check
      _
    $region91: #{tpu_custom_call.1} parent=1 // pred_check_branch
      %192 = sbr.rel (0) target = $region93
    $region92: #{tpu_custom_call.1} parent=1 // pred_region
      %194 = dma.done [#allocation18], 6144
    $region93: #{tpu_custom_call.1} parent=1 // pred_fallthru
      _
    %v195 = vld [vmem:[#allocation2] sm:$0xff]
    %v196 = vld [vmem:[#allocation2 + $0x8] sm:$0xf]
    %v197 = vld [vmem:[#allocation2 + $0xc] sm:$0xff]
    %v198 = vld [vmem:[#allocation2 + $0x14] sm:$0xf]
    %v199 = vld [vmem:[#allocation2 + $0x18] sm:$0xff]
    %v200 = vld [vmem:[#allocation2 + $0x20] sm:$0xf]
    %v201 = vld [vmem:[#allocation2 + $0x24] sm:$0xff]
    %v202 = vld [vmem:[#allocation2 + $0x2c] sm:$0xf]
    %v203 = vld [vmem:[#allocation2 + $0x30] sm:$0xff]
    %v204 = vld [vmem:[#allocation2 + $0x38] sm:$0xf]
    %v205 = vld [vmem:[#allocation2 + $0x3c] sm:$0xff]
    %v206 = vld [vmem:[#allocation2 + $0x44] sm:$0xf]
    %v207 = vld [vmem:[#allocation2 + $0x48] sm:$0xff]
    %v208 = vld [vmem:[#allocation2 + $0x50] sm:$0xf]
    %v209 = vld [vmem:[#allocation2 + $0x54] sm:$0xff]
    %v210 = vld [vmem:[#allocation2 + $0x5c] sm:$0xf]
    %v211 = vld [vmem:[#allocation2 + $0x60] sm:$0xff]
    %v212 = vld [vmem:[#allocation2 + $0x68] sm:$0xf]
    %v213 = vld [vmem:[#allocation2 + $0x6c] sm:$0xff]
    %v214 = vld [vmem:[#allocation2 + $0x74] sm:$0xf]
    %v215 = vld [vmem:[#allocation2 + $0x78] sm:$0xff]
    %v216 = vld [vmem:[#allocation2 + $0x80] sm:$0xf]
    %v217 = vld [vmem:[#allocation2 + $0x84] sm:$0xff]
    %v218 = vld [vmem:[#allocation2 + $0x8c] sm:$0xf]
    %v219 = vld [vmem:[#allocation2 + $0x90] sm:$0xff]
    %v220 = vld [vmem:[#allocation2 + $0x98] sm:$0xf]
    %v221 = vld [vmem:[#allocation2 + $0x9c] sm:$0xff]
    %v222 = vld [vmem:[#allocation2 + $0xa4] sm:$0xf]
    %v223 = vld [vmem:[#allocation2 + $0xa8] sm:$0xff]
    %v224 = vld [vmem:[#allocation2 + $0xb0] sm:$0xf]
    %v225 = vld [vmem:[#allocation2 + $0xb4] sm:$0xff]
    %v226 = vld [vmem:[#allocation2 + $0xbc] sm:$0xf]
    %v227 = vld [vmem:[#allocation5] sm:$0xff]
    %v228 = vld [vmem:[#allocation5 + $0x8] sm:$0xff]
    %v229 = vld [vmem:[#allocation5 + $0x10] sm:$0xff]
    %v230 = vld [vmem:[#allocation5 + $0x18] sm:$0xff]
    %v231 = vld [vmem:[#allocation5 + $0x20] sm:$0xff]
    %v232 = vld [vmem:[#allocation5 + $0x28] sm:$0xff]
    %v233 = vld [vmem:[#allocation5 + $0x30] sm:$0xff]
    %v234 = vld [vmem:[#allocation5 + $0x38] sm:$0xff]
    %v235 = vld [vmem:[#allocation5 + $0x40] sm:$0xff]
    %v236 = vld [vmem:[#allocation5 + $0x48] sm:$0xff]
    %v237 = vld [vmem:[#allocation5 + $0x50] sm:$0xff]
    %v238 = vld [vmem:[#allocation5 + $0x58] sm:$0xff]
    %v239 = vld [vmem:[#allocation5 + $0x60] sm:$0xff]
    %v240 = vld [vmem:[#allocation5 + $0x68] sm:$0xff]
    %v241 = vld [vmem:[#allocation5 + $0x70] sm:$0xff]
    %v242 = vld [vmem:[#allocation5 + $0x78] sm:$0xff]
    %v243 = vld [vmem:[#allocation5 + $0x80] sm:$0xff]
    %v244 = vld [vmem:[#allocation5 + $0x88] sm:$0xff]
    %v245 = vld [vmem:[#allocation5 + $0x90] sm:$0xff]
    %v246 = vld [vmem:[#allocation5 + $0x98] sm:$0xff]
    %v247 = vld [vmem:[#allocation5 + $0xa0] sm:$0xff]
    %v248 = vld [vmem:[#allocation5 + $0xa8] sm:$0xff]
    %v249 = vld [vmem:[#allocation5 + $0xb0] sm:$0xff]
    %v250 = vld [vmem:[#allocation5 + $0xb8] sm:$0xff]
    %v251 = vld [vmem:[#allocation5 + $0xc0] sm:$0xff]
    %v252 = vld [vmem:[#allocation5 + $0xc8] sm:$0xff]
    %v253 = vld [vmem:[#allocation5 + $0xd0] sm:$0xff]
    %v254 = vld [vmem:[#allocation5 + $0xd8] sm:$0xff]
    %v255 = vld [vmem:[#allocation5 + $0xe0] sm:$0xff]
    %v256 = vld [vmem:[#allocation5 + $0xe8] sm:$0xff]
    %v257 = vld [vmem:[#allocation5 + $0xf0] sm:$0xff]
    %v258 = vld [vmem:[#allocation5 + $0xf8] sm:$0xff]
    %v259 = vld [vmem:[#allocation5 + $0x100] sm:$0xff]
    %v260 = vld [vmem:[#allocation5 + $0x108] sm:$0xff]
    %v261 = vld [vmem:[#allocation5 + $0x110] sm:$0xff]
    %v262 = vld [vmem:[#allocation5 + $0x118] sm:$0xff]
    %v263 = vld [vmem:[#allocation5 + $0x120] sm:$0xff]
    %v264 = vld [vmem:[#allocation5 + $0x128] sm:$0xff]
    %v265 = vld [vmem:[#allocation5 + $0x130] sm:$0xff]
    %v266 = vld [vmem:[#allocation5 + $0x138] sm:$0xff]
    %v267 = vld [vmem:[#allocation5 + $0x140] sm:$0xff]
    %v268 = vld [vmem:[#allocation5 + $0x148] sm:$0xff]
    %v269 = vld [vmem:[#allocation5 + $0x150] sm:$0xff]
    %v270 = vld [vmem:[#allocation5 + $0x158] sm:$0xff]
    %v271 = vld [vmem:[#allocation5 + $0x160] sm:$0xff]
    %v272 = vld [vmem:[#allocation5 + $0x168] sm:$0xff]
    %v273 = vld [vmem:[#allocation5 + $0x170] sm:$0xff]
    %v274 = vld [vmem:[#allocation5 + $0x178] sm:$0xff]
    %v275 = vld [vmem:[#allocation7] sm:$0x3]
    %v277 = vperm.slane %v275, 0
    %v278 = vperm.slane %v275, 1
    %v313 = vunpack.c.l.b16 %v195
    %v314 = vunpack.c.h.b16 %v195
    %v315 = vunpack.c.l.b16 %v196
    %v316 = vunpack.c.l.b16 %v197
    %v317 = vunpack.c.h.b16 %v197
    %v318 = vunpack.c.l.b16 %v198
    %v319 = vunpack.c.l.b16 %v199
    %v320 = vunpack.c.h.b16 %v199
    %v321 = vunpack.c.l.b16 %v200
    %v322 = vunpack.c.l.b16 %v201
    %v323 = vunpack.c.h.b16 %v201
    %v324 = vunpack.c.l.b16 %v202
    %v325 = vunpack.c.l.b16 %v203
    %v326 = vunpack.c.h.b16 %v203
    %v327 = vunpack.c.l.b16 %v204
    %v328 = vunpack.c.l.b16 %v205
    %v329 = vunpack.c.h.b16 %v205
    %v330 = vunpack.c.l.b16 %v206
    %v331 = vunpack.c.l.b16 %v207
    %v332 = vunpack.c.h.b16 %v207
    %v333 = vunpack.c.l.b16 %v208
    %v334 = vunpack.c.l.b16 %v209
    %v335 = vunpack.c.h.b16 %v209
    %v336 = vunpack.c.l.b16 %v210
    %v337 = vunpack.c.l.b16 %v211
    %v338 = vunpack.c.h.b16 %v211
    %v339 = vunpack.c.l.b16 %v212
    %v340 = vunpack.c.l.b16 %v213
    %v341 = vunpack.c.h.b16 %v213
    %v342 = vunpack.c.l.b16 %v214
    %v343 = vunpack.c.l.b16 %v215
    %v344 = vunpack.c.h.b16 %v215
    %v345 = vunpack.c.l.b16 %v216
    %v346 = vunpack.c.l.b16 %v217
    %v347 = vunpack.c.h.b16 %v217
    %v348 = vunpack.c.l.b16 %v218
    %v349 = vunpack.c.l.b16 %v219
    %v350 = vunpack.c.h.b16 %v219
    %v351 = vunpack.c.l.b16 %v220
    %v352 = vunpack.c.l.b16 %v221
    %v353 = vunpack.c.h.b16 %v221
    %v354 = vunpack.c.l.b16 %v222
    %v355 = vunpack.c.l.b16 %v223
    %v356 = vunpack.c.h.b16 %v223
    %v357 = vunpack.c.l.b16 %v224
    %v358 = vunpack.c.l.b16 %v225
    %v359 = vunpack.c.h.b16 %v225
    %v360 = vunpack.c.l.b16 %v226
    %v361 = vpack.c.b16 %v316, %v313
    %v362 = vpack.c.b16 %v317, %v314
    %v363 = vpack.c.b16 %v318, %v315
    %v364 = vpack.c.b16 %v322, %v319
    %v365 = vpack.c.b16 %v323, %v320
    %v366 = vpack.c.b16 %v324, %v321
    %v367 = vpack.c.b16 %v328, %v325
    %v368 = vpack.c.b16 %v329, %v326
    %v369 = vpack.c.b16 %v330, %v327
    %v370 = vpack.c.b16 %v334, %v331
    %v371 = vpack.c.b16 %v335, %v332
    %v372 = vpack.c.b16 %v336, %v333
    %v373 = vpack.c.b16 %v340, %v337
    %v374 = vpack.c.b16 %v341, %v338
    %v375 = vpack.c.b16 %v342, %v339
    %v376 = vpack.c.b16 %v346, %v343
    %v377 = vpack.c.b16 %v347, %v344
    %v378 = vpack.c.b16 %v348, %v345
    %v379 = vpack.c.b16 %v352, %v349
    %v380 = vpack.c.b16 %v353, %v350
    %v381 = vpack.c.b16 %v354, %v351
    %v382 = vpack.c.b16 %v358, %v355
    %v383 = vpack.c.b16 %v359, %v356
    %v384 = vpack.c.b16 %v360, %v357
    %v457 = vunpack.c.l.b16 %v227
    %v458 = vunpack.c.h.b16 %v227
    %v459 = vunpack.c.l.b16 %v228
    %v460 = vunpack.c.h.b16 %v228
    %v461 = vunpack.c.l.b16 %v229
    %v462 = vunpack.c.h.b16 %v229
    %v463 = vunpack.c.l.b16 %v230
    %v464 = vunpack.c.h.b16 %v230
    %v465 = vunpack.c.l.b16 %v231
    %v466 = vunpack.c.h.b16 %v231
    %v467 = vunpack.c.l.b16 %v232
    %v468 = vunpack.c.h.b16 %v232
    %v469 = vunpack.c.l.b16 %v233
    %v470 = vunpack.c.h.b16 %v233
    %v471 = vunpack.c.l.b16 %v234
    %v472 = vunpack.c.h.b16 %v234
    %v473 = vunpack.c.l.b16 %v235
    %v474 = vunpack.c.h.b16 %v235
    %v475 = vunpack.c.l.b16 %v236
    %v476 = vunpack.c.h.b16 %v236
    %v477 = vunpack.c.l.b16 %v237
    %v478 = vunpack.c.h.b16 %v237
    %v479 = vunpack.c.l.b16 %v238
    %v480 = vunpack.c.h.b16 %v238
    %v481 = vunpack.c.l.b16 %v239
    %v482 = vunpack.c.h.b16 %v239
    %v483 = vunpack.c.l.b16 %v240
    %v484 = vunpack.c.h.b16 %v240
    %v485 = vunpack.c.l.b16 %v241
    %v486 = vunpack.c.h.b16 %v241
    %v487 = vunpack.c.l.b16 %v242
    %v488 = vunpack.c.h.b16 %v242
    %v489 = vunpack.c.l.b16 %v243
    %v490 = vunpack.c.h.b16 %v243
    %v491 = vunpack.c.l.b16 %v244
    %v492 = vunpack.c.h.b16 %v244
    %v493 = vunpack.c.l.b16 %v245
    %v494 = vunpack.c.h.b16 %v245
    %v495 = vunpack.c.l.b16 %v246
    %v496 = vunpack.c.h.b16 %v246
    %v497 = vunpack.c.l.b16 %v247
    %v498 = vunpack.c.h.b16 %v247
    %v499 = vunpack.c.l.b16 %v248
    %v500 = vunpack.c.h.b16 %v248
    %v501 = vunpack.c.l.b16 %v249
    %v502 = vunpack.c.h.b16 %v249
    %v503 = vunpack.c.l.b16 %v250
    %v504 = vunpack.c.h.b16 %v250
    %v505 = vunpack.c.l.b16 %v251
    %v506 = vunpack.c.h.b16 %v251
    %v507 = vunpack.c.l.b16 %v252
    %v508 = vunpack.c.h.b16 %v252
    %v509 = vunpack.c.l.b16 %v253
    %v510 = vunpack.c.h.b16 %v253
    %v511 = vunpack.c.l.b16 %v254
    %v512 = vunpack.c.h.b16 %v254
    %v513 = vunpack.c.l.b16 %v255
    %v514 = vunpack.c.h.b16 %v255
    %v515 = vunpack.c.l.b16 %v256
    %v516 = vunpack.c.h.b16 %v256
    %v517 = vunpack.c.l.b16 %v257
    %v518 = vunpack.c.h.b16 %v257
    %v519 = vunpack.c.l.b16 %v258
    %v520 = vunpack.c.h.b16 %v258
    %v521 = vunpack.c.l.b16 %v259
    %v522 = vunpack.c.h.b16 %v259
    %v523 = vunpack.c.l.b16 %v260
    %v524 = vunpack.c.h.b16 %v260
    %v525 = vunpack.c.l.b16 %v261
    %v526 = vunpack.c.h.b16 %v261
    %v527 = vunpack.c.l.b16 %v262
    %v528 = vunpack.c.h.b16 %v262
    %v529 = vunpack.c.l.b16 %v263
    %v530 = vunpack.c.h.b16 %v263
    %v531 = vunpack.c.l.b16 %v264
    %v532 = vunpack.c.h.b16 %v264
    %v533 = vunpack.c.l.b16 %v265
    %v534 = vunpack.c.h.b16 %v265
    %v535 = vunpack.c.l.b16 %v266
    %v536 = vunpack.c.h.b16 %v266
    %v537 = vunpack.c.l.b16 %v267
    %v538 = vunpack.c.h.b16 %v267
    %v539 = vunpack.c.l.b16 %v268
    %v540 = vunpack.c.h.b16 %v268
    %v541 = vunpack.c.l.b16 %v269
    %v542 = vunpack.c.h.b16 %v269
    %v543 = vunpack.c.l.b16 %v270
    %v544 = vunpack.c.h.b16 %v270
    %v545 = vunpack.c.l.b16 %v271
    %v546 = vunpack.c.h.b16 %v271
    %v547 = vunpack.c.l.b16 %v272
    %v548 = vunpack.c.h.b16 %v272
    %v549 = vunpack.c.l.b16 %v273
    %v550 = vunpack.c.h.b16 %v273
    %v551 = vunpack.c.l.b16 %v274
    %v552 = vunpack.c.h.b16 %v274
    %v553 = vpack.c.b16 %v459, %v457
    %v554 = vpack.c.b16 %v460, %v458
    %v555 = vpack.c.b16 %v463, %v461
    %v556 = vpack.c.b16 %v464, %v462
    %v557 = vpack.c.b16 %v467, %v465
    %v558 = vpack.c.b16 %v468, %v466
    %v559 = vpack.c.b16 %v471, %v469
    %v560 = vpack.c.b16 %v472, %v470
    %v561 = vpack.c.b16 %v475, %v473
    %v562 = vpack.c.b16 %v476, %v474
    %v563 = vpack.c.b16 %v479, %v477
    %v564 = vpack.c.b16 %v480, %v478
    %v565 = vpack.c.b16 %v483, %v481
    %v566 = vpack.c.b16 %v484, %v482
    %v567 = vpack.c.b16 %v487, %v485
    %v568 = vpack.c.b16 %v488, %v486
    %v569 = vpack.c.b16 %v491, %v489
    %v570 = vpack.c.b16 %v492, %v490
    %v571 = vpack.c.b16 %v495, %v493
    %v572 = vpack.c.b16 %v496, %v494
    %v573 = vpack.c.b16 %v499, %v497
    %v574 = vpack.c.b16 %v500, %v498
    %v575 = vpack.c.b16 %v503, %v501
    %v576 = vpack.c.b16 %v504, %v502
    %v577 = vpack.c.b16 %v507, %v505
    %v578 = vpack.c.b16 %v508, %v506
    %v579 = vpack.c.b16 %v511, %v509
    %v580 = vpack.c.b16 %v512, %v510
    %v581 = vpack.c.b16 %v515, %v513
    %v582 = vpack.c.b16 %v516, %v514
    %v583 = vpack.c.b16 %v519, %v517
    %v584 = vpack.c.b16 %v520, %v518
    %v585 = vpack.c.b16 %v523, %v521
    %v586 = vpack.c.b16 %v524, %v522
    %v587 = vpack.c.b16 %v527, %v525
    %v588 = vpack.c.b16 %v528, %v526
    %v589 = vpack.c.b16 %v531, %v529
    %v590 = vpack.c.b16 %v532, %v530
    %v591 = vpack.c.b16 %v535, %v533
    %v592 = vpack.c.b16 %v536, %v534
    %v593 = vpack.c.b16 %v539, %v537
    %v594 = vpack.c.b16 %v540, %v538
    %v595 = vpack.c.b16 %v543, %v541
    %v596 = vpack.c.b16 %v544, %v542
    %v597 = vpack.c.b16 %v547, %v545
    %v598 = vpack.c.b16 %v548, %v546
    %v599 = vpack.c.b16 %v551, %v549
    %v600 = vpack.c.b16 %v552, %v550
    %649 = vmatpush.bf16.msra.mxu0 %v567
    %650 = vmatpush.bf16.msra.mxu0 %v565
    %651 = vmatpush.bf16.msra.mxu0 %v563
    %652 = vmatpush.bf16.msra.mxu0 %v561
    %653 = vmatpush.bf16.msra.mxu0 %v559
    %654 = vmatpush.bf16.msra.mxu0 %v557
    %655 = vmatpush.bf16.msra.mxu0 %v555
    %656 = vmatpush.bf16.msra.mxu0 %v553
    %657 = vmatmul.bf16.gmra.mxu0 %v361
    %v658 = vpop.f32.mrf.mxu0
    %v659 = vadd.f32 %v277, %v658
    %v660 = vpop.f32.mrf.mxu0
    %v661 = vadd.f32 %v277, %v660
    %662 = vmatmul.bf16.gmra.mxu0 %v364
    %v663 = vpop.f32.mrf.mxu0
    %v664 = vadd.f32 %v277, %v663
    %v665 = vpop.f32.mrf.mxu0
    %v666 = vadd.f32 %v277, %v665
    %667 = vmatmul.bf16.gmra.mxu0 %v367
    %v668 = vpop.f32.mrf.mxu0
    %v669 = vadd.f32 %v277, %v668
    %v670 = vpop.f32.mrf.mxu0
    %v671 = vadd.f32 %v277, %v670
    %672 = vmatmul.bf16.gmra.mxu0 %v370
    %v673 = vpop.f32.mrf.mxu0
    %v674 = vadd.f32 %v277, %v673
    %v675 = vpop.f32.mrf.mxu0
    %v676 = vadd.f32 %v277, %v675
    %677 = vmatmul.bf16.gmra.mxu0 %v373
    %v678 = vpop.f32.mrf.mxu0
    %v679 = vadd.f32 %v277, %v678
    %v680 = vpop.f32.mrf.mxu0
    %v681 = vadd.f32 %v277, %v680
    %682 = vmatmul.bf16.gmra.mxu0 %v376
    %v683 = vpop.f32.mrf.mxu0
    %v684 = vadd.f32 %v277, %v683
    %v685 = vpop.f32.mrf.mxu0
    %v686 = vadd.f32 %v277, %v685
    %687 = vmatmul.bf16.gmra.mxu0 %v379
    %v688 = vpop.f32.mrf.mxu0
    %v689 = vadd.f32 %v277, %v688
    %v690 = vpop.f32.mrf.mxu0
    %v691 = vadd.f32 %v277, %v690
    %692 = vmatmul.bf16.gmra.mxu0 %v382
    %v693 = vpop.f32.mrf.mxu0
    %v694 = vadd.f32 %v277, %v693
    %v695 = vpop.f32.mrf.mxu0
    %v696 = vadd.f32 %v277, %v695
    %697 = vdwg.mxu0
    %698 = vmatpush.bf16.msra.mxu0 %v583
    %699 = vmatpush.bf16.msra.mxu0 %v581
    %700 = vmatpush.bf16.msra.mxu0 %v579
    %701 = vmatpush.bf16.msra.mxu0 %v577
    %702 = vmatpush.bf16.msra.mxu0 %v575
    %703 = vmatpush.bf16.msra.mxu0 %v573
    %704 = vmatpush.bf16.msra.mxu0 %v571
    %705 = vmatpush.bf16.msra.mxu0 %v569
    %706 = vmatmul.bf16.gmra.mxu0 %v362
    %v707 = vpop.f32.mrf.mxu0
    %v708 = vadd.f32 %v659, %v707
    %v709 = vpop.f32.mrf.mxu0
    %v710 = vadd.f32 %v661, %v709
    %711 = vmatmul.bf16.gmra.mxu0 %v365
    %v712 = vpop.f32.mrf.mxu0
    %v713 = vadd.f32 %v664, %v712
    %v714 = vpop.f32.mrf.mxu0
    %v715 = vadd.f32 %v666, %v714
    %716 = vmatmul.bf16.gmra.mxu0 %v368
    %v717 = vpop.f32.mrf.mxu0
    %v718 = vadd.f32 %v669, %v717
    %v719 = vpop.f32.mrf.mxu0
    %v720 = vadd.f32 %v671, %v719
    %721 = vmatmul.bf16.gmra.mxu0 %v371
    %v722 = vpop.f32.mrf.mxu0
    %v723 = vadd.f32 %v674, %v722
    %v724 = vpop.f32.mrf.mxu0
    %v725 = vadd.f32 %v676, %v724
    %726 = vmatmul.bf16.gmra.mxu0 %v374
    %v727 = vpop.f32.mrf.mxu0
    %v728 = vadd.f32 %v679, %v727
    %v729 = vpop.f32.mrf.mxu0
    %v730 = vadd.f32 %v681, %v729
    %731 = vmatmul.bf16.gmra.mxu0 %v377
    %v732 = vpop.f32.mrf.mxu0
    %v733 = vadd.f32 %v684, %v732
    %v734 = vpop.f32.mrf.mxu0
    %v735 = vadd.f32 %v686, %v734
    %736 = vmatmul.bf16.gmra.mxu0 %v380
    %v737 = vpop.f32.mrf.mxu0
    %v738 = vadd.f32 %v689, %v737
    %v739 = vpop.f32.mrf.mxu0
    %v740 = vadd.f32 %v691, %v739
    %741 = vmatmul.bf16.gmra.mxu0 %v383
    %v742 = vpop.f32.mrf.mxu0
    %v743 = vadd.f32 %v694, %v742
    %v744 = vpop.f32.mrf.mxu0
    %v745 = vadd.f32 %v696, %v744
    %746 = vdwg.mxu0
    %747 = vmatpush.bf16.msra.mxu0 %v599
    %748 = vmatpush.bf16.msra.mxu0 %v597
    %749 = vmatpush.bf16.msra.mxu0 %v595
    %750 = vmatpush.bf16.msra.mxu0 %v593
    %751 = vmatpush.bf16.msra.mxu0 %v591
    %752 = vmatpush.bf16.msra.mxu0 %v589
    %753 = vmatpush.bf16.msra.mxu0 %v587
    %754 = vmatpush.bf16.msra.mxu0 %v585
    %755 = vmatmul.bf16.gmra.mxu0 %v363
    %v756 = vpop.f32.mrf.mxu0
    %v757 = vadd.f32 %v708, %v756
    %v758 = vpop.f32.mrf.mxu0
    %v759 = vadd.f32 %v710, %v758
    %760 = vmatmul.bf16.gmra.mxu0 %v366
    %v761 = vpop.f32.mrf.mxu0
    %v762 = vadd.f32 %v713, %v761
    %v763 = vpop.f32.mrf.mxu0
    %v764 = vadd.f32 %v715, %v763
    %765 = vmatmul.bf16.gmra.mxu0 %v369
    %v766 = vpop.f32.mrf.mxu0
    %v767 = vadd.f32 %v718, %v766
    %v768 = vpop.f32.mrf.mxu0
    %v769 = vadd.f32 %v720, %v768
    %770 = vmatmul.bf16.gmra.mxu0 %v372
    %v771 = vpop.f32.mrf.mxu0
    %v772 = vadd.f32 %v723, %v771
    %v773 = vpop.f32.mrf.mxu0
    %v774 = vadd.f32 %v725, %v773
    %775 = vmatmul.bf16.gmra.mxu0 %v375
    %v776 = vpop.f32.mrf.mxu0
    %v777 = vadd.f32 %v728, %v776
    %v778 = vpop.f32.mrf.mxu0
    %v779 = vadd.f32 %v730, %v778
    %780 = vmatmul.bf16.gmra.mxu0 %v378
    %v781 = vpop.f32.mrf.mxu0
    %v782 = vadd.f32 %v733, %v781
    %v783 = vpop.f32.mrf.mxu0
    %v784 = vadd.f32 %v735, %v783
    %785 = vmatmul.bf16.gmra.mxu0 %v381
    %v786 = vpop.f32.mrf.mxu0
    %v787 = vadd.f32 %v738, %v786
    %v788 = vpop.f32.mrf.mxu0
    %v789 = vadd.f32 %v740, %v788
    %790 = vmatmul.bf16.gmra.mxu0 %v384
    %v791 = vpop.f32.mrf.mxu0
    %v792 = vadd.f32 %v743, %v791
    %v793 = vpop.f32.mrf.mxu0
    %v794 = vadd.f32 %v745, %v793
    %795 = vdwg.mxu0
    %796 = vmatpush.bf16.msra.mxu0 %v568
    %797 = vmatpush.bf16.msra.mxu0 %v566
    %798 = vmatpush.bf16.msra.mxu0 %v564
    %799 = vmatpush.bf16.msra.mxu0 %v562
    %800 = vmatpush.bf16.msra.mxu0 %v560
    %801 = vmatpush.bf16.msra.mxu0 %v558
    %802 = vmatpush.bf16.msra.mxu0 %v556
    %803 = vmatpush.bf16.msra.mxu0 %v554
    %804 = vmatmul.bf16.gmra.mxu0 %v361
    %v805 = vpop.f32.mrf.mxu0
    %v806 = vadd.f32 %v278, %v805
    %v807 = vpop.f32.mrf.mxu0
    %v808 = vadd.f32 %v278, %v807
    %809 = vmatmul.bf16.gmra.mxu0 %v364
    %v810 = vpop.f32.mrf.mxu0
    %v811 = vadd.f32 %v278, %v810
    %v812 = vpop.f32.mrf.mxu0
    %v813 = vadd.f32 %v278, %v812
    %814 = vmatmul.bf16.gmra.mxu0 %v367
    %v815 = vpop.f32.mrf.mxu0
    %v816 = vadd.f32 %v278, %v815
    %v817 = vpop.f32.mrf.mxu0
    %v818 = vadd.f32 %v278, %v817
    %819 = vmatmul.bf16.gmra.mxu0 %v370
    %v820 = vpop.f32.mrf.mxu0
    %v821 = vadd.f32 %v278, %v820
    %v822 = vpop.f32.mrf.mxu0
    %v823 = vadd.f32 %v278, %v822
    %824 = vmatmul.bf16.gmra.mxu0 %v373
    %v825 = vpop.f32.mrf.mxu0
    %v826 = vadd.f32 %v278, %v825
    %v827 = vpop.f32.mrf.mxu0
    %v828 = vadd.f32 %v278, %v827
    %829 = vmatmul.bf16.gmra.mxu0 %v376
    %v830 = vpop.f32.mrf.mxu0
    %v831 = vadd.f32 %v278, %v830
    %v832 = vpop.f32.mrf.mxu0
    %v833 = vadd.f32 %v278, %v832
    %834 = vmatmul.bf16.gmra.mxu0 %v379
    %v835 = vpop.f32.mrf.mxu0
    %v836 = vadd.f32 %v278, %v835
    %v837 = vpop.f32.mrf.mxu0
    %v838 = vadd.f32 %v278, %v837
    %839 = vmatmul.bf16.gmra.mxu0 %v382
    %v840 = vpop.f32.mrf.mxu0
    %v841 = vadd.f32 %v278, %v840
    %v842 = vpop.f32.mrf.mxu0
    %v843 = vadd.f32 %v278, %v842
    %844 = vdwg.mxu0
    %845 = vmatpush.bf16.msra.mxu0 %v584
    %846 = vmatpush.bf16.msra.mxu0 %v582
    %847 = vmatpush.bf16.msra.mxu0 %v580
    %848 = vmatpush.bf16.msra.mxu0 %v578
    %849 = vmatpush.bf16.msra.mxu0 %v576
    %850 = vmatpush.bf16.msra.mxu0 %v574
    %851 = vmatpush.bf16.msra.mxu0 %v572
    %852 = vmatpush.bf16.msra.mxu0 %v570
    %853 = vmatmul.bf16.gmra.mxu0 %v362
    %v854 = vpop.f32.mrf.mxu0
    %v855 = vadd.f32 %v806, %v854
    %v856 = vpop.f32.mrf.mxu0
    %v857 = vadd.f32 %v808, %v856
    %858 = vmatmul.bf16.gmra.mxu0 %v365
    %v859 = vpop.f32.mrf.mxu0
    %v860 = vadd.f32 %v811, %v859
    %v861 = vpop.f32.mrf.mxu0
    %v862 = vadd.f32 %v813, %v861
    %863 = vmatmul.bf16.gmra.mxu0 %v368
    %v864 = vpop.f32.mrf.mxu0
    %v865 = vadd.f32 %v816, %v864
    %v866 = vpop.f32.mrf.mxu0
    %v867 = vadd.f32 %v818, %v866
    %868 = vmatmul.bf16.gmra.mxu0 %v371
    %v869 = vpop.f32.mrf.mxu0
    %v870 = vadd.f32 %v821, %v869
    %v871 = vpop.f32.mrf.mxu0
    %v872 = vadd.f32 %v823, %v871
    %873 = vmatmul.bf16.gmra.mxu0 %v374
    %v874 = vpop.f32.mrf.mxu0
    %v875 = vadd.f32 %v826, %v874
    %v876 = vpop.f32.mrf.mxu0
    %v877 = vadd.f32 %v828, %v876
    %878 = vmatmul.bf16.gmra.mxu0 %v377
    %v879 = vpop.f32.mrf.mxu0
    %v880 = vadd.f32 %v831, %v879
    %v881 = vpop.f32.mrf.mxu0
    %v882 = vadd.f32 %v833, %v881
    %883 = vmatmul.bf16.gmra.mxu0 %v380
    %v884 = vpop.f32.mrf.mxu0
    %v885 = vadd.f32 %v836, %v884
    %v886 = vpop.f32.mrf.mxu0
    %v887 = vadd.f32 %v838, %v886
    %888 = vmatmul.bf16.gmra.mxu0 %v383
    %v889 = vpop.f32.mrf.mxu0
    %v890 = vadd.f32 %v841, %v889
    %v891 = vpop.f32.mrf.mxu0
    %v892 = vadd.f32 %v843, %v891
    %893 = vdwg.mxu0
    %894 = vmatpush.bf16.msra.mxu0 %v600
    %895 = vmatpush.bf16.msra.mxu0 %v598
    %896 = vmatpush.bf16.msra.mxu0 %v596
    %897 = vmatpush.bf16.msra.mxu0 %v594
    %898 = vmatpush.bf16.msra.mxu0 %v592
    %899 = vmatpush.bf16.msra.mxu0 %v590
    %900 = vmatpush.bf16.msra.mxu0 %v588
    %901 = vmatpush.bf16.msra.mxu0 %v586
    %902 = vmatmul.bf16.gmra.mxu0 %v363
    %v903 = vpop.f32.mrf.mxu0
    %v904 = vadd.f32 %v855, %v903
    %v905 = vpop.f32.mrf.mxu0
    %v906 = vadd.f32 %v857, %v905
    %907 = vmatmul.bf16.gmra.mxu0 %v366
    %v908 = vpop.f32.mrf.mxu0
    %v909 = vadd.f32 %v860, %v908
    %v910 = vpop.f32.mrf.mxu0
    %v911 = vadd.f32 %v862, %v910
    %912 = vmatmul.bf16.gmra.mxu0 %v369
    %v913 = vpop.f32.mrf.mxu0
    %v914 = vadd.f32 %v865, %v913
    %v915 = vpop.f32.mrf.mxu0
    %v916 = vadd.f32 %v867, %v915
    %917 = vmatmul.bf16.gmra.mxu0 %v372
    %v918 = vpop.f32.mrf.mxu0
    %v919 = vadd.f32 %v870, %v918
    %v920 = vpop.f32.mrf.mxu0
    %v921 = vadd.f32 %v872, %v920
    %922 = vmatmul.bf16.gmra.mxu0 %v375
    %v923 = vpop.f32.mrf.mxu0
    %v924 = vadd.f32 %v875, %v923
    %v925 = vpop.f32.mrf.mxu0
    %v926 = vadd.f32 %v877, %v925
    %927 = vmatmul.bf16.gmra.mxu0 %v378
    %v928 = vpop.f32.mrf.mxu0
    %v929 = vadd.f32 %v880, %v928
    %v930 = vpop.f32.mrf.mxu0
    %v931 = vadd.f32 %v882, %v930
    %932 = vmatmul.bf16.gmra.mxu0 %v381
    %v933 = vpop.f32.mrf.mxu0
    %v934 = vadd.f32 %v885, %v933
    %v935 = vpop.f32.mrf.mxu0
    %v936 = vadd.f32 %v887, %v935
    %937 = vmatmul.bf16.gmra.mxu0 %v384
    %v938 = vpop.f32.mrf.mxu0
    %v939 = vadd.f32 %v890, %v938
    %v940 = vpop.f32.mrf.mxu0
    %v941 = vadd.f32 %v892, %v940
    %942 = vdwg.mxu0
    %v943 = vpack.c.bf16 %v759, %v757
    %v944 = vpack.c.bf16 %v906, %v904
    %v945 = vpack.c.bf16 %v764, %v762
    %v946 = vpack.c.bf16 %v911, %v909
    %v947 = vpack.c.bf16 %v769, %v767
    %v948 = vpack.c.bf16 %v916, %v914
    %v949 = vpack.c.bf16 %v774, %v772
    %v950 = vpack.c.bf16 %v921, %v919
    %v951 = vpack.c.bf16 %v779, %v777
    %v952 = vpack.c.bf16 %v926, %v924
    %v953 = vpack.c.bf16 %v784, %v782
    %v954 = vpack.c.bf16 %v931, %v929
    %v955 = vpack.c.bf16 %v789, %v787
    %v956 = vpack.c.bf16 %v936, %v934
    %v957 = vpack.c.bf16 %v794, %v792
    %v958 = vpack.c.bf16 %v941, %v939
    %v959 = vunpack.c.l.bf16 %v943
    %v960 = vunpack.c.l.bf16 %v944
    %v961 = vunpack.c.h.bf16 %v943
    %v962 = vunpack.c.h.bf16 %v944
    %v963 = vunpack.c.l.bf16 %v945
    %v964 = vunpack.c.l.bf16 %v946
    %v965 = vunpack.c.h.bf16 %v945
    %v966 = vunpack.c.h.bf16 %v946
    %v967 = vunpack.c.l.bf16 %v947
    %v968 = vunpack.c.l.bf16 %v948
    %v969 = vunpack.c.h.bf16 %v947
    %v970 = vunpack.c.h.bf16 %v948
    %v971 = vunpack.c.l.bf16 %v949
    %v972 = vunpack.c.l.bf16 %v950
    %v973 = vunpack.c.h.bf16 %v949
    %v974 = vunpack.c.h.bf16 %v950
    %v975 = vunpack.c.l.bf16 %v951
    %v976 = vunpack.c.l.bf16 %v952
    %v977 = vunpack.c.h.bf16 %v951
    %v978 = vunpack.c.h.bf16 %v952
    %v979 = vunpack.c.l.bf16 %v953
    %v980 = vunpack.c.l.bf16 %v954
    %v981 = vunpack.c.h.bf16 %v953
    %v982 = vunpack.c.h.bf16 %v954
    %v983 = vunpack.c.l.bf16 %v955
    %v984 = vunpack.c.l.bf16 %v956
    %v985 = vunpack.c.h.bf16 %v955
    %v986 = vunpack.c.h.bf16 %v956
    %v987 = vunpack.c.l.bf16 %v957
    %v988 = vunpack.c.l.bf16 %v958
    %v989 = vunpack.c.h.bf16 %v957
    %v990 = vunpack.c.h.bf16 %v958
    %v991 = vtanh.pop %v959
    %v992 = vtanh.pop %v960
    %v993 = vtanh.pop %v961
    %v994 = vtanh.pop %v962
    %v995 = vtanh.pop %v963
    %v996 = vtanh.pop %v964
    %v997 = vtanh.pop %v965
    %v998 = vtanh.pop %v966
    %v999 = vtanh.pop %v967
    %v1000 = vtanh.pop %v968
    %v1001 = vtanh.pop %v969
    %v1002 = vtanh.pop %v970
    %v1003 = vtanh.pop %v971
    %v1004 = vtanh.pop %v972
    %v1005 = vtanh.pop %v973
    %v1006 = vtanh.pop %v974
    %v1007 = vtanh.pop %v975
    %v1008 = vtanh.pop %v976
    %v1009 = vtanh.pop %v977
    %v1010 = vtanh.pop %v978
    %v1011 = vtanh.pop %v979
    %v1012 = vtanh.pop %v980
    %v1013 = vtanh.pop %v981
    %v1014 = vtanh.pop %v982
    %v1015 = vtanh.pop %v983
    %v1016 = vtanh.pop %v984
    %v1017 = vtanh.pop %v985
    %v1018 = vtanh.pop %v986
    %v1019 = vtanh.pop %v987
    %v1020 = vtanh.pop %v988
    %v1021 = vtanh.pop %v989
    %v1022 = vtanh.pop %v990
    %v1023 = vpack.c.bf16 %v993, %v991
    %v1024 = vpack.c.bf16 %v994, %v992
    %v1025 = vpack.c.bf16 %v997, %v995
    %v1026 = vpack.c.bf16 %v998, %v996
    %v1027 = vpack.c.bf16 %v1001, %v999
    %v1028 = vpack.c.bf16 %v1002, %v1000
    %v1029 = vpack.c.bf16 %v1005, %v1003
    %v1030 = vpack.c.bf16 %v1006, %v1004
    %v1031 = vpack.c.bf16 %v1009, %v1007
    %v1032 = vpack.c.bf16 %v1010, %v1008
    %v1033 = vpack.c.bf16 %v1013, %v1011
    %v1034 = vpack.c.bf16 %v1014, %v1012
    %v1035 = vpack.c.bf16 %v1017, %v1015
    %v1036 = vpack.c.bf16 %v1018, %v1016
    %v1037 = vpack.c.bf16 %v1021, %v1019
    %v1038 = vpack.c.bf16 %v1022, %v1020
    %v1039 = vld [vmem:[#allocation8] sm:$0xf]
    %v1040 = vld [vmem:[#allocation8 + $0x4] sm:$0xf]
    %v1041 = vld [vmem:[#allocation8 + $0x8] sm:$0xf]
    %v1042 = vld [vmem:[#allocation8 + $0xc] sm:$0xf]
    %v1043 = vld [vmem:[#allocation8 + $0x10] sm:$0xf]
    %v1044 = vld [vmem:[#allocation8 + $0x14] sm:$0xf]
    %v1045 = vld [vmem:[#allocation8 + $0x18] sm:$0xf]
    %v1046 = vld [vmem:[#allocation8 + $0x1c] sm:$0xf]
    %v1047 = vld [vmem:[#allocation8 + $0x20] sm:$0xf]
    %v1048 = vld [vmem:[#allocation8 + $0x24] sm:$0xf]
    %v1049 = vld [vmem:[#allocation8 + $0x28] sm:$0xf]
    %v1050 = vld [vmem:[#allocation8 + $0x2c] sm:$0xf]
    %v1051 = vld [vmem:[#allocation8 + $0x30] sm:$0xf]
    %v1052 = vld [vmem:[#allocation8 + $0x34] sm:$0xf]
    %v1053 = vld [vmem:[#allocation8 + $0x38] sm:$0xf]
    %v1054 = vld [vmem:[#allocation8 + $0x3c] sm:$0xf]
    %v1055 = vld [vmem:[#allocation8 + $0x40] sm:$0xf]
    %v1056 = vld [vmem:[#allocation8 + $0x44] sm:$0xf]
    %v1057 = vld [vmem:[#allocation8 + $0x48] sm:$0xf]
    %v1058 = vld [vmem:[#allocation8 + $0x4c] sm:$0xf]
    %v1059 = vld [vmem:[#allocation8 + $0x50] sm:$0xf]
    %v1060 = vld [vmem:[#allocation8 + $0x54] sm:$0xf]
    %v1061 = vld [vmem:[#allocation8 + $0x58] sm:$0xf]
    %v1062 = vld [vmem:[#allocation8 + $0x5c] sm:$0xf]
    %v1063 = vld [vmem:[#allocation8 + $0x60] sm:$0xf]
    %v1064 = vld [vmem:[#allocation8 + $0x64] sm:$0xf]
    %v1065 = vld [vmem:[#allocation8 + $0x68] sm:$0xf]
    %v1066 = vld [vmem:[#allocation8 + $0x6c] sm:$0xf]
    %v1067 = vld [vmem:[#allocation8 + $0x70] sm:$0xf]
    %v1068 = vld [vmem:[#allocation8 + $0x74] sm:$0xf]
    %v1069 = vld [vmem:[#allocation8 + $0x78] sm:$0xf]
    %v1070 = vld [vmem:[#allocation8 + $0x7c] sm:$0xf]
    %v1071 = vld [vmem:[#allocation10] sm:$0x1]
    %v1073 = vperm.slane %v1071, 0
    %v1107 = vunpack.c.l.b16 %v1039
    %v1108 = vunpack.c.l.b16 %v1040
    %v1109 = vunpack.c.l.b16 %v1041
    %v1110 = vunpack.c.l.b16 %v1042
    %v1111 = vunpack.c.l.b16 %v1043
    %v1112 = vunpack.c.l.b16 %v1044
    %v1113 = vunpack.c.l.b16 %v1045
    %v1114 = vunpack.c.l.b16 %v1046
    %v1115 = vunpack.c.l.b16 %v1047
    %v1116 = vunpack.c.l.b16 %v1048
    %v1117 = vunpack.c.l.b16 %v1049
    %v1118 = vunpack.c.l.b16 %v1050
    %v1119 = vunpack.c.l.b16 %v1051
    %v1120 = vunpack.c.l.b16 %v1052
    %v1121 = vunpack.c.l.b16 %v1053
    %v1122 = vunpack.c.l.b16 %v1054
    %v1123 = vunpack.c.l.b16 %v1055
    %v1124 = vunpack.c.l.b16 %v1056
    %v1125 = vunpack.c.l.b16 %v1057
    %v1126 = vunpack.c.l.b16 %v1058
    %v1127 = vunpack.c.l.b16 %v1059
    %v1128 = vunpack.c.l.b16 %v1060
    %v1129 = vunpack.c.l.b16 %v1061
    %v1130 = vunpack.c.l.b16 %v1062
    %v1131 = vunpack.c.l.b16 %v1063
    %v1132 = vunpack.c.l.b16 %v1064
    %v1133 = vunpack.c.l.b16 %v1065
    %v1134 = vunpack.c.l.b16 %v1066
    %v1135 = vunpack.c.l.b16 %v1067
    %v1136 = vunpack.c.l.b16 %v1068
    %v1137 = vunpack.c.l.b16 %v1069
    %v1138 = vunpack.c.l.b16 %v1070
    %v1139 = vpack.c.b16 %v1108, %v1107
    %v1140 = vpack.c.b16 %v1110, %v1109
    %v1141 = vpack.c.b16 %v1112, %v1111
    %v1142 = vpack.c.b16 %v1114, %v1113
    %v1143 = vpack.c.b16 %v1116, %v1115
    %v1144 = vpack.c.b16 %v1118, %v1117
    %v1145 = vpack.c.b16 %v1120, %v1119
    %v1146 = vpack.c.b16 %v1122, %v1121
    %v1147 = vpack.c.b16 %v1124, %v1123
    %v1148 = vpack.c.b16 %v1126, %v1125
    %v1149 = vpack.c.b16 %v1128, %v1127
    %v1150 = vpack.c.b16 %v1130, %v1129
    %v1151 = vpack.c.b16 %v1132, %v1131
    %v1152 = vpack.c.b16 %v1134, %v1133
    %v1153 = vpack.c.b16 %v1136, %v1135
    %v1154 = vpack.c.b16 %v1138, %v1137
    %1171 = vmatpush.bf16.msra.mxu0 %v1146
    %1172 = vmatpush.bf16.msra.mxu0 %v1145
    %1173 = vmatpush.bf16.msra.mxu0 %v1144
    %1174 = vmatpush.bf16.msra.mxu0 %v1143
    %1175 = vmatpush.bf16.msra.mxu0 %v1142
    %1176 = vmatpush.bf16.msra.mxu0 %v1141
    %1177 = vmatpush.bf16.msra.mxu0 %v1140
    %1178 = vmatpush.bf16.msra.mxu0 %v1139
    %1179 = vmatmul.bf16.gmra.mxu0 %v1023
    %v1180 = vpop.f32.mrf.mxu0
    %v1181 = vadd.f32 %v1073, %v1180
    %v1182 = vpop.f32.mrf.mxu0
    %v1183 = vadd.f32 %v1073, %v1182
    %1184 = vmatmul.bf16.gmra.mxu0 %v1025
    %v1185 = vpop.f32.mrf.mxu0
    %v1186 = vadd.f32 %v1073, %v1185
    %v1187 = vpop.f32.mrf.mxu0
    %v1188 = vadd.f32 %v1073, %v1187
    %1189 = vmatmul.bf16.gmra.mxu0 %v1027
    %v1190 = vpop.f32.mrf.mxu0
    %v1191 = vadd.f32 %v1073, %v1190
    %v1192 = vpop.f32.mrf.mxu0
    %v1193 = vadd.f32 %v1073, %v1192
    %1194 = vmatmul.bf16.gmra.mxu0 %v1029
    %v1195 = vpop.f32.mrf.mxu0
    %v1196 = vadd.f32 %v1073, %v1195
    %v1197 = vpop.f32.mrf.mxu0
    %v1198 = vadd.f32 %v1073, %v1197
    %1199 = vmatmul.bf16.gmra.mxu0 %v1031
    %v1200 = vpop.f32.mrf.mxu0
    %v1201 = vadd.f32 %v1073, %v1200
    %v1202 = vpop.f32.mrf.mxu0
    %v1203 = vadd.f32 %v1073, %v1202
    %1204 = vmatmul.bf16.gmra.mxu0 %v1033
    %v1205 = vpop.f32.mrf.mxu0
    %v1206 = vadd.f32 %v1073, %v1205
    %v1207 = vpop.f32.mrf.mxu0
    %v1208 = vadd.f32 %v1073, %v1207
    %1209 = vmatmul.bf16.gmra.mxu0 %v1035
    %v1210 = vpop.f32.mrf.mxu0
    %v1211 = vadd.f32 %v1073, %v1210
    %v1212 = vpop.f32.mrf.mxu0
    %v1213 = vadd.f32 %v1073, %v1212
    %1214 = vmatmul.bf16.gmra.mxu0 %v1037
    %v1215 = vpop.f32.mrf.mxu0
    %v1216 = vadd.f32 %v1073, %v1215
    %v1217 = vpop.f32.mrf.mxu0
    %v1218 = vadd.f32 %v1073, %v1217
    %1219 = vdwg.mxu0
    %1220 = vmatpush.bf16.msra.mxu0 %v1154
    %1221 = vmatpush.bf16.msra.mxu0 %v1153
    %1222 = vmatpush.bf16.msra.mxu0 %v1152
    %1223 = vmatpush.bf16.msra.mxu0 %v1151
    %1224 = vmatpush.bf16.msra.mxu0 %v1150
    %1225 = vmatpush.bf16.msra.mxu0 %v1149
    %1226 = vmatpush.bf16.msra.mxu0 %v1148
    %1227 = vmatpush.bf16.msra.mxu0 %v1147
    %1228 = vmatmul.bf16.gmra.mxu0 %v1024
    %v1229 = vpop.f32.mrf.mxu0
    %v1230 = vadd.f32 %v1181, %v1229
    %v1231 = vpop.f32.mrf.mxu0
    %v1232 = vadd.f32 %v1183, %v1231
    %1233 = vmatmul.bf16.gmra.mxu0 %v1026
    %v1234 = vpop.f32.mrf.mxu0
    %v1235 = vadd.f32 %v1186, %v1234
    %v1236 = vpop.f32.mrf.mxu0
    %v1237 = vadd.f32 %v1188, %v1236
    %1238 = vmatmul.bf16.gmra.mxu0 %v1028
    %v1239 = vpop.f32.mrf.mxu0
    %v1240 = vadd.f32 %v1191, %v1239
    %v1241 = vpop.f32.mrf.mxu0
    %v1242 = vadd.f32 %v1193, %v1241
    %1243 = vmatmul.bf16.gmra.mxu0 %v1030
    %v1244 = vpop.f32.mrf.mxu0
    %v1245 = vadd.f32 %v1196, %v1244
    %v1246 = vpop.f32.mrf.mxu0
    %v1247 = vadd.f32 %v1198, %v1246
    %1248 = vmatmul.bf16.gmra.mxu0 %v1032
    %v1249 = vpop.f32.mrf.mxu0
    %v1250 = vadd.f32 %v1201, %v1249
    %v1251 = vpop.f32.mrf.mxu0
    %v1252 = vadd.f32 %v1203, %v1251
    %1253 = vmatmul.bf16.gmra.mxu0 %v1034
    %v1254 = vpop.f32.mrf.mxu0
    %v1255 = vadd.f32 %v1206, %v1254
    %v1256 = vpop.f32.mrf.mxu0
    %v1257 = vadd.f32 %v1208, %v1256
    %1258 = vmatmul.bf16.gmra.mxu0 %v1036
    %v1259 = vpop.f32.mrf.mxu0
    %v1260 = vadd.f32 %v1211, %v1259
    %v1261 = vpop.f32.mrf.mxu0
    %v1262 = vadd.f32 %v1213, %v1261
    %1263 = vmatmul.bf16.gmra.mxu0 %v1038
    %v1264 = vpop.f32.mrf.mxu0
    %v1265 = vadd.f32 %v1216, %v1264
    %v1266 = vpop.f32.mrf.mxu0
    %v1267 = vadd.f32 %v1218, %v1266
    %1268 = vdwg.mxu0
    %v1269 = vpack.c.bf16 %v1232, %v1230
    %v1270 = vpack.c.bf16 %v1237, %v1235
    %v1271 = vpack.c.bf16 %v1242, %v1240
    %v1272 = vpack.c.bf16 %v1247, %v1245
    %v1273 = vpack.c.bf16 %v1252, %v1250
    %v1274 = vpack.c.bf16 %v1257, %v1255
    %v1275 = vpack.c.bf16 %v1262, %v1260
    %v1276 = vpack.c.bf16 %v1267, %v1265
    %v1277 = vunpack.c.l.bf16 %v1269
    %v1278 = vunpack.c.h.bf16 %v1269
    %v1279 = vunpack.c.l.bf16 %v1270
    %v1280 = vunpack.c.h.bf16 %v1270
    %v1281 = vunpack.c.l.bf16 %v1271
    %v1282 = vunpack.c.h.bf16 %v1271
    %v1283 = vunpack.c.l.bf16 %v1272
    %v1284 = vunpack.c.h.bf16 %v1272
    %v1285 = vunpack.c.l.bf16 %v1273
    %v1286 = vunpack.c.h.bf16 %v1273
    %v1287 = vunpack.c.l.bf16 %v1274
    %v1288 = vunpack.c.h.bf16 %v1274
    %v1289 = vunpack.c.l.bf16 %v1275
    %v1290 = vunpack.c.h.bf16 %v1275
    %v1291 = vunpack.c.l.bf16 %v1276
    %v1292 = vunpack.c.h.bf16 %v1276
    %v1293 = vtanh.pop %v1277
    %v1294 = vtanh.pop %v1278
    %v1295 = vtanh.pop %v1279
    %v1296 = vtanh.pop %v1280
    %v1297 = vtanh.pop %v1281
    %v1298 = vtanh.pop %v1282
    %v1299 = vtanh.pop %v1283
    %v1300 = vtanh.pop %v1284
    %v1301 = vtanh.pop %v1285
    %v1302 = vtanh.pop %v1286
    %v1303 = vtanh.pop %v1287
    %v1304 = vtanh.pop %v1288
    %v1305 = vtanh.pop %v1289
    %v1306 = vtanh.pop %v1290
    %v1307 = vtanh.pop %v1291
    %v1308 = vtanh.pop %v1292
    %v1309 = vpack.c.bf16 %v1294, %v1293
    %v1310 = vpack.c.bf16 %v1296, %v1295
    %v1311 = vpack.c.bf16 %v1298, %v1297
    %v1312 = vpack.c.bf16 %v1300, %v1299
    %v1313 = vpack.c.bf16 %v1302, %v1301
    %v1314 = vpack.c.bf16 %v1304, %v1303
    %v1315 = vpack.c.bf16 %v1306, %v1305
    %v1316 = vpack.c.bf16 %v1308, %v1307
    %v1317 = vld [vmem:[#allocation11] sm:$0xf]
    %v1318 = vld [vmem:[#allocation11 + $0x4] sm:$0xf]
    %v1319 = vld [vmem:[#allocation11 + $0x8] sm:$0xf]
    %v1320 = vld [vmem:[#allocation11 + $0xc] sm:$0xf]
    %v1321 = vld [vmem:[#allocation11 + $0x10] sm:$0xf]
    %v1322 = vld [vmem:[#allocation11 + $0x14] sm:$0xf]
    %v1323 = vld [vmem:[#allocation11 + $0x18] sm:$0xf]
    %v1324 = vld [vmem:[#allocation11 + $0x1c] sm:$0xf]
    %v1325 = vld [vmem:[#allocation11 + $0x20] sm:$0xf]
    %v1326 = vld [vmem:[#allocation11 + $0x24] sm:$0xf]
    %v1327 = vld [vmem:[#allocation11 + $0x28] sm:$0xf]
    %v1328 = vld [vmem:[#allocation11 + $0x2c] sm:$0xf]
    %v1329 = vld [vmem:[#allocation11 + $0x30] sm:$0xf]
    %v1330 = vld [vmem:[#allocation11 + $0x34] sm:$0xf]
    %v1331 = vld [vmem:[#allocation11 + $0x38] sm:$0xf]
    %v1332 = vld [vmem:[#allocation11 + $0x3c] sm:$0xf]
    %v1333 = vld [vmem:[#allocation13] sm:$0x1]
    %v1335 = vperm.slane %v1333, 0
    %v1353 = vunpack.c.l.b16 %v1317
    %v1354 = vunpack.c.l.b16 %v1318
    %v1355 = vunpack.c.l.b16 %v1319
    %v1356 = vunpack.c.l.b16 %v1320
    %v1357 = vunpack.c.l.b16 %v1321
    %v1358 = vunpack.c.l.b16 %v1322
    %v1359 = vunpack.c.l.b16 %v1323
    %v1360 = vunpack.c.l.b16 %v1324
    %v1361 = vunpack.c.l.b16 %v1325
    %v1362 = vunpack.c.l.b16 %v1326
    %v1363 = vunpack.c.l.b16 %v1327
    %v1364 = vunpack.c.l.b16 %v1328
    %v1365 = vunpack.c.l.b16 %v1329
    %v1366 = vunpack.c.l.b16 %v1330
    %v1367 = vunpack.c.l.b16 %v1331
    %v1368 = vunpack.c.l.b16 %v1332
    %v1369 = vpack.c.b16 %v1354, %v1353
    %v1370 = vpack.c.b16 %v1356, %v1355
    %v1371 = vpack.c.b16 %v1358, %v1357
    %v1372 = vpack.c.b16 %v1360, %v1359
    %v1373 = vpack.c.b16 %v1362, %v1361
    %v1374 = vpack.c.b16 %v1364, %v1363
    %v1375 = vpack.c.b16 %v1366, %v1365
    %v1376 = vpack.c.b16 %v1368, %v1367
    %1385 = vmatpush.bf16.msra.mxu0 %v1376
    %1386 = vmatpush.bf16.msra.mxu0 %v1375
    %1387 = vmatpush.bf16.msra.mxu0 %v1374
    %1388 = vmatpush.bf16.msra.mxu0 %v1373
    %1389 = vmatpush.bf16.msra.mxu0 %v1372
    %1390 = vmatpush.bf16.msra.mxu0 %v1371
    %1391 = vmatpush.bf16.msra.mxu0 %v1370
    %1392 = vmatpush.bf16.msra.mxu0 %v1369
    %1393 = vmatmul.bf16.gmra.mxu0 %v1309
    %v1394 = vpop.f32.mrf.mxu0
    %v1395 = vadd.f32 %v1335, %v1394
    %v1396 = vpop.f32.mrf.mxu0
    %v1397 = vadd.f32 %v1335, %v1396
    %1398 = vmatmul.bf16.gmra.mxu0 %v1310
    %v1399 = vpop.f32.mrf.mxu0
    %v1400 = vadd.f32 %v1335, %v1399
    %v1401 = vpop.f32.mrf.mxu0
    %v1402 = vadd.f32 %v1335, %v1401
    %1403 = vmatmul.bf16.gmra.mxu0 %v1311
    %v1404 = vpop.f32.mrf.mxu0
    %v1405 = vadd.f32 %v1335, %v1404
    %v1406 = vpop.f32.mrf.mxu0
    %v1407 = vadd.f32 %v1335, %v1406
    %1408 = vmatmul.bf16.gmra.mxu0 %v1312
    %v1409 = vpop.f32.mrf.mxu0
    %v1410 = vadd.f32 %v1335, %v1409
    %v1411 = vpop.f32.mrf.mxu0
    %v1412 = vadd.f32 %v1335, %v1411
    %1413 = vmatmul.bf16.gmra.mxu0 %v1313
    %v1414 = vpop.f32.mrf.mxu0
    %v1415 = vadd.f32 %v1335, %v1414
    %v1416 = vpop.f32.mrf.mxu0
    %v1417 = vadd.f32 %v1335, %v1416
    %1418 = vmatmul.bf16.gmra.mxu0 %v1314
    %v1419 = vpop.f32.mrf.mxu0
    %v1420 = vadd.f32 %v1335, %v1419
    %v1421 = vpop.f32.mrf.mxu0
    %v1422 = vadd.f32 %v1335, %v1421
    %1423 = vmatmul.bf16.gmra.mxu0 %v1315
    %v1424 = vpop.f32.mrf.mxu0
    %v1425 = vadd.f32 %v1335, %v1424
    %v1426 = vpop.f32.mrf.mxu0
    %v1427 = vadd.f32 %v1335, %v1426
    %1428 = vmatmul.bf16.gmra.mxu0 %v1316
    %v1429 = vpop.f32.mrf.mxu0
    %v1430 = vadd.f32 %v1335, %v1429
    %v1431 = vpop.f32.mrf.mxu0
    %v1432 = vadd.f32 %v1335, %v1431
    %1433 = vdwg.mxu0
    %v1434 = vpack.c.bf16 %v1397, %v1395
    %v1435 = vpack.c.bf16 %v1402, %v1400
    %v1436 = vpack.c.bf16 %v1407, %v1405
    %v1437 = vpack.c.bf16 %v1412, %v1410
    %v1438 = vpack.c.bf16 %v1417, %v1415
    %v1439 = vpack.c.bf16 %v1422, %v1420
    %v1440 = vpack.c.bf16 %v1427, %v1425
    %v1441 = vpack.c.bf16 %v1432, %v1430
    %v1442 = vld [vmem:[#allocation14] sm:$0xf]
    %v1443 = vld [vmem:[#allocation14 + $0x4] sm:$0xf]
    %v1444 = vld [vmem:[#allocation14 + $0x8] sm:$0xf]
    %v1445 = vld [vmem:[#allocation14 + $0xc] sm:$0xf]
    %v1446 = vld [vmem:[#allocation14 + $0x10] sm:$0xf]
    %v1447 = vld [vmem:[#allocation14 + $0x14] sm:$0xf]
    %v1448 = vld [vmem:[#allocation14 + $0x18] sm:$0xf]
    %v1449 = vld [vmem:[#allocation14 + $0x1c] sm:$0xf]
    %v1450 = vld [vmem:[#allocation14 + $0x20] sm:$0xf]
    %v1451 = vld [vmem:[#allocation14 + $0x24] sm:$0xf]
    %v1452 = vld [vmem:[#allocation14 + $0x28] sm:$0xf]
    %v1453 = vld [vmem:[#allocation14 + $0x2c] sm:$0xf]
    %v1454 = vld [vmem:[#allocation14 + $0x30] sm:$0xf]
    %v1455 = vld [vmem:[#allocation14 + $0x34] sm:$0xf]
    %v1456 = vld [vmem:[#allocation14 + $0x38] sm:$0xf]
    %v1457 = vld [vmem:[#allocation14 + $0x3c] sm:$0xf]
    %v1458 = vld [vmem:[%s8] sm:$0x1]
    %v1460 = vperm.slane %v1458, 0
    %v1478 = vunpack.c.l.b16 %v1442
    %v1479 = vunpack.c.l.b16 %v1443
    %v1480 = vunpack.c.l.b16 %v1444
    %v1481 = vunpack.c.l.b16 %v1445
    %v1482 = vunpack.c.l.b16 %v1446
    %v1483 = vunpack.c.l.b16 %v1447
    %v1484 = vunpack.c.l.b16 %v1448
    %v1485 = vunpack.c.l.b16 %v1449
    %v1486 = vunpack.c.l.b16 %v1450
    %v1487 = vunpack.c.l.b16 %v1451
    %v1488 = vunpack.c.l.b16 %v1452
    %v1489 = vunpack.c.l.b16 %v1453
    %v1490 = vunpack.c.l.b16 %v1454
    %v1491 = vunpack.c.l.b16 %v1455
    %v1492 = vunpack.c.l.b16 %v1456
    %v1493 = vunpack.c.l.b16 %v1457
    %v1494 = vpack.c.b16 %v1479, %v1478
    %v1495 = vpack.c.b16 %v1481, %v1480
    %v1496 = vpack.c.b16 %v1483, %v1482
    %v1497 = vpack.c.b16 %v1485, %v1484
    %v1498 = vpack.c.b16 %v1487, %v1486
    %v1499 = vpack.c.b16 %v1489, %v1488
    %v1500 = vpack.c.b16 %v1491, %v1490
    %v1501 = vpack.c.b16 %v1493, %v1492
    %1510 = vmatpush.bf16.msra.mxu0 %v1501
    %1511 = vmatpush.bf16.msra.mxu0 %v1500
    %1512 = vmatpush.bf16.msra.mxu0 %v1499
    %1513 = vmatpush.bf16.msra.mxu0 %v1498
    %1514 = vmatpush.bf16.msra.mxu0 %v1497
    %1515 = vmatpush.bf16.msra.mxu0 %v1496
    %1516 = vmatpush.bf16.msra.mxu0 %v1495
    %1517 = vmatpush.bf16.msra.mxu0 %v1494
    %1518 = vmatmul.bf16.gmra.mxu0 %v1434
    %v1519 = vpop.f32.mrf.mxu0
    %v1520 = vadd.f32 %v1460, %v1519
    %v1521 = vpop.f32.mrf.mxu0
    %v1522 = vadd.f32 %v1460, %v1521
    %1523 = vmatmul.bf16.gmra.mxu0 %v1435
    %v1524 = vpop.f32.mrf.mxu0
    %v1525 = vadd.f32 %v1460, %v1524
    %v1526 = vpop.f32.mrf.mxu0
    %v1527 = vadd.f32 %v1460, %v1526
    %1528 = vmatmul.bf16.gmra.mxu0 %v1436
    %v1529 = vpop.f32.mrf.mxu0
    %v1530 = vadd.f32 %v1460, %v1529
    %v1531 = vpop.f32.mrf.mxu0
    %v1532 = vadd.f32 %v1460, %v1531
    %1533 = vmatmul.bf16.gmra.mxu0 %v1437
    %v1534 = vpop.f32.mrf.mxu0
    %v1535 = vadd.f32 %v1460, %v1534
    %v1536 = vpop.f32.mrf.mxu0
    %v1537 = vadd.f32 %v1460, %v1536
    %1538 = vmatmul.bf16.gmra.mxu0 %v1438
    %v1539 = vpop.f32.mrf.mxu0
    %v1540 = vadd.f32 %v1460, %v1539
    %v1541 = vpop.f32.mrf.mxu0
    %v1542 = vadd.f32 %v1460, %v1541
    %1543 = vmatmul.bf16.gmra.mxu0 %v1439
    %v1544 = vpop.f32.mrf.mxu0
    %v1545 = vadd.f32 %v1460, %v1544
    %v1546 = vpop.f32.mrf.mxu0
    %v1547 = vadd.f32 %v1460, %v1546
    %1548 = vmatmul.bf16.gmra.mxu0 %v1440
    %v1549 = vpop.f32.mrf.mxu0
    %v1550 = vadd.f32 %v1460, %v1549
    %v1551 = vpop.f32.mrf.mxu0
    %v1552 = vadd.f32 %v1460, %v1551
    %1553 = vmatmul.bf16.gmra.mxu0 %v1441
    %v1554 = vpop.f32.mrf.mxu0
    %v1555 = vadd.f32 %v1460, %v1554
    %v1556 = vpop.f32.mrf.mxu0
    %v1557 = vadd.f32 %v1460, %v1556
    %1558 = vdwg.mxu0
    %v1559 = vpack.c.bf16 %v1522, %v1520
    %v1560 = vpack.c.bf16 %v1527, %v1525
    %v1561 = vpack.c.bf16 %v1532, %v1530
    %v1562 = vpack.c.bf16 %v1537, %v1535
    %v1563 = vpack.c.bf16 %v1542, %v1540
    %v1564 = vpack.c.bf16 %v1547, %v1545
    %v1565 = vpack.c.bf16 %v1552, %v1550
    %v1566 = vpack.c.bf16 %v1557, %v1555
    %v1567 = vunpack.c.l.bf16 %v1559
    %v1568 = vunpack.c.h.bf16 %v1559
    %v1569 = vunpack.c.l.bf16 %v1560
    %v1570 = vunpack.c.h.bf16 %v1560
    %v1571 = vunpack.c.l.bf16 %v1561
    %v1572 = vunpack.c.h.bf16 %v1561
    %v1573 = vunpack.c.l.bf16 %v1562
    %v1574 = vunpack.c.h.bf16 %v1562
    %v1575 = vunpack.c.l.bf16 %v1563
    %v1576 = vunpack.c.h.bf16 %v1563
    %v1577 = vunpack.c.l.bf16 %v1564
    %v1578 = vunpack.c.h.bf16 %v1564
    %v1579 = vunpack.c.l.bf16 %v1565
    %v1580 = vunpack.c.h.bf16 %v1565
    %v1581 = vunpack.c.l.bf16 %v1566
    %v1582 = vunpack.c.h.bf16 %v1566
    %v1583 = vtanh.pop %v1567
    %v1584 = vtanh.pop %v1568
    %v1585 = vtanh.pop %v1569
    %v1586 = vtanh.pop %v1570
    %v1587 = vtanh.pop %v1571
    %v1588 = vtanh.pop %v1572
    %v1589 = vtanh.pop %v1573
    %v1590 = vtanh.pop %v1574
    %v1591 = vtanh.pop %v1575
    %v1592 = vtanh.pop %v1576
    %v1593 = vtanh.pop %v1577
    %v1594 = vtanh.pop %v1578
    %v1595 = vtanh.pop %v1579
    %v1596 = vtanh.pop %v1580
    %v1597 = vtanh.pop %v1581
    %v1598 = vtanh.pop %v1582
    %v1599 = vpack.c.bf16 %v1584, %v1583
    %v1600 = vpack.c.bf16 %v1586, %v1585
    %v1601 = vpack.c.bf16 %v1588, %v1587
    %v1602 = vpack.c.bf16 %v1590, %v1589
    %v1603 = vpack.c.bf16 %v1592, %v1591
    %v1604 = vpack.c.bf16 %v1594, %v1593
    %v1605 = vpack.c.bf16 %v1596, %v1595
    %v1606 = vpack.c.bf16 %v1598, %v1597
    %v1607 = vld [vmem:[#allocation16] sm:$0xff]
    %v1608 = vld [vmem:[#allocation16 + $0x8] sm:$0xff]
    %v1609 = vld [vmem:[#allocation16 + $0x10] sm:$0xff]
    %v1610 = vld [vmem:[#allocation16 + $0x18] sm:$0xff]
    %v1611 = vld [vmem:[#allocation16 + $0x20] sm:$0xff]
    %v1612 = vld [vmem:[#allocation16 + $0x28] sm:$0xff]
    %v1613 = vld [vmem:[#allocation16 + $0x30] sm:$0xff]
    %v1614 = vld [vmem:[#allocation16 + $0x38] sm:$0xff]
    %v1615 = vld [vmem:[#allocation16 + $0x40] sm:$0xff]
    %v1616 = vld [vmem:[#allocation16 + $0x48] sm:$0xff]
    %v1617 = vld [vmem:[#allocation16 + $0x50] sm:$0xff]
    %v1618 = vld [vmem:[#allocation16 + $0x58] sm:$0xff]
    %v1619 = vld [vmem:[#allocation16 + $0x60] sm:$0xff]
    %v1620 = vld [vmem:[#allocation16 + $0x68] sm:$0xff]
    %v1621 = vld [vmem:[#allocation16 + $0x70] sm:$0xff]
    %v1622 = vld [vmem:[#allocation16 + $0x78] sm:$0xff]
    %v1623 = vld [vmem:[%s10] sm:$0x3]
    %v1625 = vperm.slane %v1623, 0
    %v1626 = vperm.slane %v1623, 1
    %v1645 = vunpack.c.l.b16 %v1607
    %v1646 = vunpack.c.h.b16 %v1607
    %v1647 = vunpack.c.l.b16 %v1608
    %v1648 = vunpack.c.h.b16 %v1608
    %v1649 = vunpack.c.l.b16 %v1609
    %v1650 = vunpack.c.h.b16 %v1609
    %v1651 = vunpack.c.l.b16 %v1610
    %v1652 = vunpack.c.h.b16 %v1610
    %v1653 = vunpack.c.l.b16 %v1611
    %v1654 = vunpack.c.h.b16 %v1611
    %v1655 = vunpack.c.l.b16 %v1612
    %v1656 = vunpack.c.h.b16 %v1612
    %v1657 = vunpack.c.l.b16 %v1613
    %v1658 = vunpack.c.h.b16 %v1613
    %v1659 = vunpack.c.l.b16 %v1614
    %v1660 = vunpack.c.h.b16 %v1614
    %v1661 = vunpack.c.l.b16 %v1615
    %v1662 = vunpack.c.h.b16 %v1615
    %v1663 = vunpack.c.l.b16 %v1616
    %v1664 = vunpack.c.h.b16 %v1616
    %v1665 = vunpack.c.l.b16 %v1617
    %v1666 = vunpack.c.h.b16 %v1617
    %v1667 = vunpack.c.l.b16 %v1618
    %v1668 = vunpack.c.h.b16 %v1618
    %v1669 = vunpack.c.l.b16 %v1619
    %v1670 = vunpack.c.h.b16 %v1619
    %v1671 = vunpack.c.l.b16 %v1620
    %v1672 = vunpack.c.h.b16 %v1620
    %v1673 = vunpack.c.l.b16 %v1621
    %v1674 = vunpack.c.h.b16 %v1621
    %v1675 = vunpack.c.l.b16 %v1622
    %v1676 = vunpack.c.h.b16 %v1622
    %v1677 = vpack.c.b16 %v1647, %v1645
    %v1678 = vpack.c.b16 %v1648, %v1646
    %v1679 = vpack.c.b16 %v1651, %v1649
    %v1680 = vpack.c.b16 %v1652, %v1650
    %v1681 = vpack.c.b16 %v1655, %v1653
    %v1682 = vpack.c.b16 %v1656, %v1654
    %v1683 = vpack.c.b16 %v1659, %v1657
    %v1684 = vpack.c.b16 %v1660, %v1658
    %v1685 = vpack.c.b16 %v1663, %v1661
    %v1686 = vpack.c.b16 %v1664, %v1662
    %v1687 = vpack.c.b16 %v1667, %v1665
    %v1688 = vpack.c.b16 %v1668, %v1666
    %v1689 = vpack.c.b16 %v1671, %v1669
    %v1690 = vpack.c.b16 %v1672, %v1670
    %v1691 = vpack.c.b16 %v1675, %v1673
    %v1692 = vpack.c.b16 %v1676, %v1674
    %1709 = vmatpush.bf16.msra.mxu0 %v1691
    %1710 = vmatpush.bf16.msra.mxu0 %v1689
    %1711 = vmatpush.bf16.msra.mxu0 %v1687
    %1712 = vmatpush.bf16.msra.mxu0 %v1685
    %1713 = vmatpush.bf16.msra.mxu0 %v1683
    %1714 = vmatpush.bf16.msra.mxu0 %v1681
    %1715 = vmatpush.bf16.msra.mxu0 %v1679
    %1716 = vmatpush.bf16.msra.mxu0 %v1677
    %1717 = vmatmul.bf16.gmra.mxu0 %v1599
    %v1718 = vpop.f32.mrf.mxu0
    %v1719 = vadd.f32 %v1625, %v1718
    %v1720 = vpop.f32.mrf.mxu0
    %v1721 = vadd.f32 %v1625, %v1720
    %1722 = vmatmul.bf16.gmra.mxu0 %v1600
    %v1723 = vpop.f32.mrf.mxu0
    %v1724 = vadd.f32 %v1625, %v1723
    %v1725 = vpop.f32.mrf.mxu0
    %v1726 = vadd.f32 %v1625, %v1725
    %1727 = vmatmul.bf16.gmra.mxu0 %v1601
    %v1728 = vpop.f32.mrf.mxu0
    %v1729 = vadd.f32 %v1625, %v1728
    %v1730 = vpop.f32.mrf.mxu0
    %v1731 = vadd.f32 %v1625, %v1730
    %1732 = vmatmul.bf16.gmra.mxu0 %v1602
    %v1733 = vpop.f32.mrf.mxu0
    %v1734 = vadd.f32 %v1625, %v1733
    %v1735 = vpop.f32.mrf.mxu0
    %v1736 = vadd.f32 %v1625, %v1735
    %1737 = vmatmul.bf16.gmra.mxu0 %v1603
    %v1738 = vpop.f32.mrf.mxu0
    %v1739 = vadd.f32 %v1625, %v1738
    %v1740 = vpop.f32.mrf.mxu0
    %v1741 = vadd.f32 %v1625, %v1740
    %1742 = vmatmul.bf16.gmra.mxu0 %v1604
    %v1743 = vpop.f32.mrf.mxu0
    %v1744 = vadd.f32 %v1625, %v1743
    %v1745 = vpop.f32.mrf.mxu0
    %v1746 = vadd.f32 %v1625, %v1745
    %1747 = vmatmul.bf16.gmra.mxu0 %v1605
    %v1748 = vpop.f32.mrf.mxu0
    %v1749 = vadd.f32 %v1625, %v1748
    %v1750 = vpop.f32.mrf.mxu0
    %v1751 = vadd.f32 %v1625, %v1750
    %1752 = vmatmul.bf16.gmra.mxu0 %v1606
    %v1753 = vpop.f32.mrf.mxu0
    %v1754 = vadd.f32 %v1625, %v1753
    %v1755 = vpop.f32.mrf.mxu0
    %v1756 = vadd.f32 %v1625, %v1755
    %1757 = vdwg.mxu0
    %1758 = vmatpush.bf16.msra.mxu0 %v1692
    %1759 = vmatpush.bf16.msra.mxu0 %v1690
    %1760 = vmatpush.bf16.msra.mxu0 %v1688
    %1761 = vmatpush.bf16.msra.mxu0 %v1686
    %1762 = vmatpush.bf16.msra.mxu0 %v1684
    %1763 = vmatpush.bf16.msra.mxu0 %v1682
    %1764 = vmatpush.bf16.msra.mxu0 %v1680
    %1765 = vmatpush.bf16.msra.mxu0 %v1678
    %1766 = vmatmul.bf16.gmra.mxu0 %v1599
    %v1767 = vpop.f32.mrf.mxu0
    %v1768 = vadd.f32 %v1626, %v1767
    %v1769 = vpop.f32.mrf.mxu0
    %v1770 = vadd.f32 %v1626, %v1769
    %1771 = vmatmul.bf16.gmra.mxu0 %v1600
    %v1772 = vpop.f32.mrf.mxu0
    %v1773 = vadd.f32 %v1626, %v1772
    %v1774 = vpop.f32.mrf.mxu0
    %v1775 = vadd.f32 %v1626, %v1774
    %1776 = vmatmul.bf16.gmra.mxu0 %v1601
    %v1777 = vpop.f32.mrf.mxu0
    %v1778 = vadd.f32 %v1626, %v1777
    %v1779 = vpop.f32.mrf.mxu0
    %v1780 = vadd.f32 %v1626, %v1779
    %1781 = vmatmul.bf16.gmra.mxu0 %v1602
    %v1782 = vpop.f32.mrf.mxu0
    %v1783 = vadd.f32 %v1626, %v1782
    %v1784 = vpop.f32.mrf.mxu0
    %v1785 = vadd.f32 %v1626, %v1784
    %1786 = vmatmul.bf16.gmra.mxu0 %v1603
    %v1787 = vpop.f32.mrf.mxu0
    %v1788 = vadd.f32 %v1626, %v1787
    %v1789 = vpop.f32.mrf.mxu0
    %v1790 = vadd.f32 %v1626, %v1789
    %1791 = vmatmul.bf16.gmra.mxu0 %v1604
    %v1792 = vpop.f32.mrf.mxu0
    %v1793 = vadd.f32 %v1626, %v1792
    %v1794 = vpop.f32.mrf.mxu0
    %v1795 = vadd.f32 %v1626, %v1794
    %1796 = vmatmul.bf16.gmra.mxu0 %v1605
    %v1797 = vpop.f32.mrf.mxu0
    %v1798 = vadd.f32 %v1626, %v1797
    %v1799 = vpop.f32.mrf.mxu0
    %v1800 = vadd.f32 %v1626, %v1799
    %1801 = vmatmul.bf16.gmra.mxu0 %v1606
    %v1802 = vpop.f32.mrf.mxu0
    %v1803 = vadd.f32 %v1626, %v1802
    %v1804 = vpop.f32.mrf.mxu0
    %v1805 = vadd.f32 %v1626, %v1804
    %1806 = vdwg.mxu0
    %v1807 = vpack.c.bf16 %v1721, %v1719
    %v1808 = vpack.c.bf16 %v1770, %v1768
    %v1809 = vpack.c.bf16 %v1726, %v1724
    %v1810 = vpack.c.bf16 %v1775, %v1773
    %v1811 = vpack.c.bf16 %v1731, %v1729
    %v1812 = vpack.c.bf16 %v1780, %v1778
    %v1813 = vpack.c.bf16 %v1736, %v1734
    %v1814 = vpack.c.bf16 %v1785, %v1783
    %v1815 = vpack.c.bf16 %v1741, %v1739
    %v1816 = vpack.c.bf16 %v1790, %v1788
    %v1817 = vpack.c.bf16 %v1746, %v1744
    %v1818 = vpack.c.bf16 %v1795, %v1793
    %v1819 = vpack.c.bf16 %v1751, %v1749
    %v1820 = vpack.c.bf16 %v1800, %v1798
    %v1821 = vpack.c.bf16 %v1756, %v1754
    %v1822 = vpack.c.bf16 %v1805, %v1803
    %v1823 = vunpack.c.l.bf16 %v1807
    %v1824 = vunpack.c.l.bf16 %v1808
    %v1825 = vunpack.c.h.bf16 %v1807
    %v1826 = vunpack.c.h.bf16 %v1808
    %v1827 = vunpack.c.l.bf16 %v1809
    %v1828 = vunpack.c.l.bf16 %v1810
    %v1829 = vunpack.c.h.bf16 %v1809
    %v1830 = vunpack.c.h.bf16 %v1810
    %v1831 = vunpack.c.l.bf16 %v1811
    %v1832 = vunpack.c.l.bf16 %v1812
    %v1833 = vunpack.c.h.bf16 %v1811
    %v1834 = vunpack.c.h.bf16 %v1812
    %v1835 = vunpack.c.l.bf16 %v1813
    %v1836 = vunpack.c.l.bf16 %v1814
    %v1837 = vunpack.c.h.bf16 %v1813
    %v1838 = vunpack.c.h.bf16 %v1814
    %v1839 = vunpack.c.l.bf16 %v1815
    %v1840 = vunpack.c.l.bf16 %v1816
    %v1841 = vunpack.c.h.bf16 %v1815
    %v1842 = vunpack.c.h.bf16 %v1816
    %v1843 = vunpack.c.l.bf16 %v1817
    %v1844 = vunpack.c.l.bf16 %v1818
    %v1845 = vunpack.c.h.bf16 %v1817
    %v1846 = vunpack.c.h.bf16 %v1818
    %v1847 = vunpack.c.l.bf16 %v1819
    %v1848 = vunpack.c.l.bf16 %v1820
    %v1849 = vunpack.c.h.bf16 %v1819
    %v1850 = vunpack.c.h.bf16 %v1820
    %v1851 = vunpack.c.l.bf16 %v1821
    %v1852 = vunpack.c.l.bf16 %v1822
    %v1853 = vunpack.c.h.bf16 %v1821
    %v1854 = vunpack.c.h.bf16 %v1822
    %v1855 = vtanh.pop %v1823
    %v1856 = vtanh.pop %v1824
    %v1857 = vtanh.pop %v1825
    %v1858 = vtanh.pop %v1826
    %v1859 = vtanh.pop %v1827
    %v1860 = vtanh.pop %v1828
    %v1861 = vtanh.pop %v1829
    %v1862 = vtanh.pop %v1830
    %v1863 = vtanh.pop %v1831
    %v1864 = vtanh.pop %v1832
    %v1865 = vtanh.pop %v1833
    %v1866 = vtanh.pop %v1834
    %v1867 = vtanh.pop %v1835
    %v1868 = vtanh.pop %v1836
    %v1869 = vtanh.pop %v1837
    %v1870 = vtanh.pop %v1838
    %v1871 = vtanh.pop %v1839
    %v1872 = vtanh.pop %v1840
    %v1873 = vtanh.pop %v1841
    %v1874 = vtanh.pop %v1842
    %v1875 = vtanh.pop %v1843
    %v1876 = vtanh.pop %v1844
    %v1877 = vtanh.pop %v1845
    %v1878 = vtanh.pop %v1846
    %v1879 = vtanh.pop %v1847
    %v1880 = vtanh.pop %v1848
    %v1881 = vtanh.pop %v1849
    %v1882 = vtanh.pop %v1850
    %v1883 = vtanh.pop %v1851
    %v1884 = vtanh.pop %v1852
    %v1885 = vtanh.pop %v1853
    %v1886 = vtanh.pop %v1854
    %v1887 = vpack.c.bf16 %v1857, %v1855
    %v1888 = vpack.c.bf16 %v1858, %v1856
    %v1889 = vpack.c.bf16 %v1861, %v1859
    %v1890 = vpack.c.bf16 %v1862, %v1860
    %v1891 = vpack.c.bf16 %v1865, %v1863
    %v1892 = vpack.c.bf16 %v1866, %v1864
    %v1893 = vpack.c.bf16 %v1869, %v1867
    %v1894 = vpack.c.bf16 %v1870, %v1868
    %v1895 = vpack.c.bf16 %v1873, %v1871
    %v1896 = vpack.c.bf16 %v1874, %v1872
    %v1897 = vpack.c.bf16 %v1877, %v1875
    %v1898 = vpack.c.bf16 %v1878, %v1876
    %v1899 = vpack.c.bf16 %v1881, %v1879
    %v1900 = vpack.c.bf16 %v1882, %v1880
    %v1901 = vpack.c.bf16 %v1885, %v1883
    %v1902 = vpack.c.bf16 %v1886, %v1884
    %v1903 = vld [vmem:[#allocation17] sm:$0xff]
    %v1904 = vld [vmem:[#allocation17 + $0x8] sm:$0xf]
    %v1905 = vld [vmem:[#allocation17 + $0xc] sm:$0xff]
    %v1906 = vld [vmem:[#allocation17 + $0x14] sm:$0xf]
    %v1907 = vld [vmem:[#allocation17 + $0x18] sm:$0xff]
    %v1908 = vld [vmem:[#allocation17 + $0x20] sm:$0xf]
    %v1909 = vld [vmem:[#allocation17 + $0x24] sm:$0xff]
    %v1910 = vld [vmem:[#allocation17 + $0x2c] sm:$0xf]
    %v1911 = vld [vmem:[#allocation17 + $0x30] sm:$0xff]
    %v1912 = vld [vmem:[#allocation17 + $0x38] sm:$0xf]
    %v1913 = vld [vmem:[#allocation17 + $0x3c] sm:$0xff]
    %v1914 = vld [vmem:[#allocation17 + $0x44] sm:$0xf]
    %v1915 = vld [vmem:[#allocation17 + $0x48] sm:$0xff]
    %v1916 = vld [vmem:[#allocation17 + $0x50] sm:$0xf]
    %v1917 = vld [vmem:[#allocation17 + $0x54] sm:$0xff]
    %v1918 = vld [vmem:[#allocation17 + $0x5c] sm:$0xf]
    %v1919 = vld [vmem:[#allocation17 + $0x60] sm:$0xff]
    %v1920 = vld [vmem:[#allocation17 + $0x68] sm:$0xf]
    %v1921 = vld [vmem:[#allocation17 + $0x6c] sm:$0xff]
    %v1922 = vld [vmem:[#allocation17 + $0x74] sm:$0xf]
    %v1923 = vld [vmem:[#allocation17 + $0x78] sm:$0xff]
    %v1924 = vld [vmem:[#allocation17 + $0x80] sm:$0xf]
    %v1925 = vld [vmem:[#allocation17 + $0x84] sm:$0xff]
    %v1926 = vld [vmem:[#allocation17 + $0x8c] sm:$0xf]
    %v1927 = vld [vmem:[#allocation17 + $0x90] sm:$0xff]
    %v1928 = vld [vmem:[#allocation17 + $0x98] sm:$0xf]
    %v1929 = vld [vmem:[#allocation17 + $0x9c] sm:$0xff]
    %v1930 = vld [vmem:[#allocation17 + $0xa4] sm:$0xf]
    %v1931 = vld [vmem:[#allocation17 + $0xa8] sm:$0xff]
    %v1932 = vld [vmem:[#allocation17 + $0xb0] sm:$0xf]
    %v1933 = vld [vmem:[#allocation17 + $0xb4] sm:$0xff]
    %v1934 = vld [vmem:[#allocation17 + $0xbc] sm:$0xf]
    %v1935 = vld [vmem:[#allocation17 + $0xc0] sm:$0xff]
    %v1936 = vld [vmem:[#allocation17 + $0xc8] sm:$0xf]
    %v1937 = vld [vmem:[#allocation17 + $0xcc] sm:$0xff]
    %v1938 = vld [vmem:[#allocation17 + $0xd4] sm:$0xf]
    %v1939 = vld [vmem:[#allocation17 + $0xd8] sm:$0xff]
    %v1940 = vld [vmem:[#allocation17 + $0xe0] sm:$0xf]
    %v1941 = vld [vmem:[#allocation17 + $0xe4] sm:$0xff]
    %v1942 = vld [vmem:[#allocation17 + $0xec] sm:$0xf]
    %v1943 = vld [vmem:[#allocation17 + $0xf0] sm:$0xff]
    %v1944 = vld [vmem:[#allocation17 + $0xf8] sm:$0xf]
    %v1945 = vld [vmem:[#allocation17 + $0xfc] sm:$0xff]
    %v1946 = vld [vmem:[#allocation17 + $0x104] sm:$0xf]
    %v1947 = vld [vmem:[#allocation17 + $0x108] sm:$0xff]
    %v1948 = vld [vmem:[#allocation17 + $0x110] sm:$0xf]
    %v1949 = vld [vmem:[#allocation17 + $0x114] sm:$0xff]
    %v1950 = vld [vmem:[#allocation17 + $0x11c] sm:$0xf]
    %v1951 = vld [vmem:[#allocation17 + $0x120] sm:$0xff]
    %v1952 = vld [vmem:[#allocation17 + $0x128] sm:$0xf]
    %v1953 = vld [vmem:[#allocation17 + $0x12c] sm:$0xff]
    %v1954 = vld [vmem:[#allocation17 + $0x134] sm:$0xf]
    %v1955 = vld [vmem:[#allocation17 + $0x138] sm:$0xff]
    %v1956 = vld [vmem:[#allocation17 + $0x140] sm:$0xf]
    %v1957 = vld [vmem:[#allocation17 + $0x144] sm:$0xff]
    %v1958 = vld [vmem:[#allocation17 + $0x14c] sm:$0xf]
    %v1959 = vld [vmem:[#allocation17 + $0x150] sm:$0xff]
    %v1960 = vld [vmem:[#allocation17 + $0x158] sm:$0xf]
    %v1961 = vld [vmem:[#allocation17 + $0x15c] sm:$0xff]
    %v1962 = vld [vmem:[#allocation17 + $0x164] sm:$0xf]
    %v1963 = vld [vmem:[#allocation17 + $0x168] sm:$0xff]
    %v1964 = vld [vmem:[#allocation17 + $0x170] sm:$0xf]
    %v1965 = vld [vmem:[#allocation17 + $0x174] sm:$0xff]
    %v1966 = vld [vmem:[#allocation17 + $0x17c] sm:$0xf]
    %v1967 = vld [vmem:[%s12] sm:$0x7]
    %v1969 = vperm.slane %v1967, 0
    %v1970 = vperm.slane %v1967, 1
    %v1971 = vperm.slane %v1967, 2
    %v2039 = vunpack.c.l.b16 %v1903
    %v2040 = vunpack.c.h.b16 %v1903
    %v2041 = vunpack.c.l.b16 %v1904
    %v2042 = vunpack.c.l.b16 %v1905
    %v2043 = vunpack.c.h.b16 %v1905
    %v2044 = vunpack.c.l.b16 %v1906
    %v2045 = vunpack.c.l.b16 %v1907
    %v2046 = vunpack.c.h.b16 %v1907
    %v2047 = vunpack.c.l.b16 %v1908
    %v2048 = vunpack.c.l.b16 %v1909
    %v2049 = vunpack.c.h.b16 %v1909
    %v2050 = vunpack.c.l.b16 %v1910
    %v2051 = vunpack.c.l.b16 %v1911
    %v2052 = vunpack.c.h.b16 %v1911
    %v2053 = vunpack.c.l.b16 %v1912
    %v2054 = vunpack.c.l.b16 %v1913
    %v2055 = vunpack.c.h.b16 %v1913
    %v2056 = vunpack.c.l.b16 %v1914
    %v2057 = vunpack.c.l.b16 %v1915
    %v2058 = vunpack.c.h.b16 %v1915
    %v2059 = vunpack.c.l.b16 %v1916
    %v2060 = vunpack.c.l.b16 %v1917
    %v2061 = vunpack.c.h.b16 %v1917
    %v2062 = vunpack.c.l.b16 %v1918
    %v2063 = vunpack.c.l.b16 %v1919
    %v2064 = vunpack.c.h.b16 %v1919
    %v2065 = vunpack.c.l.b16 %v1920
    %v2066 = vunpack.c.l.b16 %v1921
    %v2067 = vunpack.c.h.b16 %v1921
    %v2068 = vunpack.c.l.b16 %v1922
    %v2069 = vunpack.c.l.b16 %v1923
    %v2070 = vunpack.c.h.b16 %v1923
    %v2071 = vunpack.c.l.b16 %v1924
    %v2072 = vunpack.c.l.b16 %v1925
    %v2073 = vunpack.c.h.b16 %v1925
    %v2074 = vunpack.c.l.b16 %v1926
    %v2075 = vunpack.c.l.b16 %v1927
    %v2076 = vunpack.c.h.b16 %v1927
    %v2077 = vunpack.c.l.b16 %v1928
    %v2078 = vunpack.c.l.b16 %v1929
    %v2079 = vunpack.c.h.b16 %v1929
    %v2080 = vunpack.c.l.b16 %v1930
    %v2081 = vunpack.c.l.b16 %v1931
    %v2082 = vunpack.c.h.b16 %v1931
    %v2083 = vunpack.c.l.b16 %v1932
    %v2084 = vunpack.c.l.b16 %v1933
    %v2085 = vunpack.c.h.b16 %v1933
    %v2086 = vunpack.c.l.b16 %v1934
    %v2087 = vunpack.c.l.b16 %v1935
    %v2088 = vunpack.c.h.b16 %v1935
    %v2089 = vunpack.c.l.b16 %v1936
    %v2090 = vunpack.c.l.b16 %v1937
    %v2091 = vunpack.c.h.b16 %v1937
    %v2092 = vunpack.c.l.b16 %v1938
    %v2093 = vunpack.c.l.b16 %v1939
    %v2094 = vunpack.c.h.b16 %v1939
    %v2095 = vunpack.c.l.b16 %v1940
    %v2096 = vunpack.c.l.b16 %v1941
    %v2097 = vunpack.c.h.b16 %v1941
    %v2098 = vunpack.c.l.b16 %v1942
    %v2099 = vunpack.c.l.b16 %v1943
    %v2100 = vunpack.c.h.b16 %v1943
    %v2101 = vunpack.c.l.b16 %v1944
    %v2102 = vunpack.c.l.b16 %v1945
    %v2103 = vunpack.c.h.b16 %v1945
    %v2104 = vunpack.c.l.b16 %v1946
    %v2105 = vunpack.c.l.b16 %v1947
    %v2106 = vunpack.c.h.b16 %v1947
    %v2107 = vunpack.c.l.b16 %v1948
    %v2108 = vunpack.c.l.b16 %v1949
    %v2109 = vunpack.c.h.b16 %v1949
    %v2110 = vunpack.c.l.b16 %v1950
    %v2111 = vunpack.c.l.b16 %v1951
    %v2112 = vunpack.c.h.b16 %v1951
    %v2113 = vunpack.c.l.b16 %v1952
    %v2114 = vunpack.c.l.b16 %v1953
    %v2115 = vunpack.c.h.b16 %v1953
    %v2116 = vunpack.c.l.b16 %v1954
    %v2117 = vunpack.c.l.b16 %v1955
    %v2118 = vunpack.c.h.b16 %v1955
    %v2119 = vunpack.c.l.b16 %v1956
    %v2120 = vunpack.c.l.b16 %v1957
    %v2121 = vunpack.c.h.b16 %v1957
    %v2122 = vunpack.c.l.b16 %v1958
    %v2123 = vunpack.c.l.b16 %v1959
    %v2124 = vunpack.c.h.b16 %v1959
    %v2125 = vunpack.c.l.b16 %v1960
    %v2126 = vunpack.c.l.b16 %v1961
    %v2127 = vunpack.c.h.b16 %v1961
    %v2128 = vunpack.c.l.b16 %v1962
    %v2129 = vunpack.c.l.b16 %v1963
    %v2130 = vunpack.c.h.b16 %v1963
    %v2131 = vunpack.c.l.b16 %v1964
    %v2132 = vunpack.c.l.b16 %v1965
    %v2133 = vunpack.c.h.b16 %v1965
    %v2134 = vunpack.c.l.b16 %v1966
    %v2135 = vpack.c.b16 %v2042, %v2039
    %v2136 = vpack.c.b16 %v2043, %v2040
    %v2137 = vpack.c.b16 %v2044, %v2041
    %v2138 = vpack.c.b16 %v2048, %v2045
    %v2139 = vpack.c.b16 %v2049, %v2046
    %v2140 = vpack.c.b16 %v2050, %v2047
    %v2141 = vpack.c.b16 %v2054, %v2051
    %v2142 = vpack.c.b16 %v2055, %v2052
    %v2143 = vpack.c.b16 %v2056, %v2053
    %v2144 = vpack.c.b16 %v2060, %v2057
    %v2145 = vpack.c.b16 %v2061, %v2058
    %v2146 = vpack.c.b16 %v2062, %v2059
    %v2147 = vpack.c.b16 %v2066, %v2063
    %v2148 = vpack.c.b16 %v2067, %v2064
    %v2149 = vpack.c.b16 %v2068, %v2065
    %v2150 = vpack.c.b16 %v2072, %v2069
    %v2151 = vpack.c.b16 %v2073, %v2070
    %v2152 = vpack.c.b16 %v2074, %v2071
    %v2153 = vpack.c.b16 %v2078, %v2075
    %v2154 = vpack.c.b16 %v2079, %v2076
    %v2155 = vpack.c.b16 %v2080, %v2077
    %v2156 = vpack.c.b16 %v2084, %v2081
    %v2157 = vpack.c.b16 %v2085, %v2082
    %v2158 = vpack.c.b16 %v2086, %v2083
    %v2159 = vpack.c.b16 %v2090, %v2087
    %v2160 = vpack.c.b16 %v2091, %v2088
    %v2161 = vpack.c.b16 %v2092, %v2089
    %v2162 = vpack.c.b16 %v2096, %v2093
    %v2163 = vpack.c.b16 %v2097, %v2094
    %v2164 = vpack.c.b16 %v2098, %v2095
    %v2165 = vpack.c.b16 %v2102, %v2099
    %v2166 = vpack.c.b16 %v2103, %v2100
    %v2167 = vpack.c.b16 %v2104, %v2101
    %v2168 = vpack.c.b16 %v2108, %v2105
    %v2169 = vpack.c.b16 %v2109, %v2106
    %v2170 = vpack.c.b16 %v2110, %v2107
    %v2171 = vpack.c.b16 %v2114, %v2111
    %v2172 = vpack.c.b16 %v2115, %v2112
    %v2173 = vpack.c.b16 %v2116, %v2113
    %v2174 = vpack.c.b16 %v2120, %v2117
    %v2175 = vpack.c.b16 %v2121, %v2118
    %v2176 = vpack.c.b16 %v2122, %v2119
    %v2177 = vpack.c.b16 %v2126, %v2123
    %v2178 = vpack.c.b16 %v2127, %v2124
    %v2179 = vpack.c.b16 %v2128, %v2125
    %v2180 = vpack.c.b16 %v2132, %v2129
    %v2181 = vpack.c.b16 %v2133, %v2130
    %v2182 = vpack.c.b16 %v2134, %v2131
    %2231 = vmatpush.bf16.msra.mxu0 %v2156
    %2232 = vmatpush.bf16.msra.mxu0 %v2153
    %2233 = vmatpush.bf16.msra.mxu0 %v2150
    %2234 = vmatpush.bf16.msra.mxu0 %v2147
    %2235 = vmatpush.bf16.msra.mxu0 %v2144
    %2236 = vmatpush.bf16.msra.mxu0 %v2141
    %2237 = vmatpush.bf16.msra.mxu0 %v2138
    %2238 = vmatpush.bf16.msra.mxu0 %v2135
    %2239 = vmatmul.bf16.gmra.mxu0 %v1887
    %v2240 = vpop.f32.mrf.mxu0
    %v2241 = vadd.f32 %v1969, %v2240
    %v2242 = vpop.f32.mrf.mxu0
    %v2243 = vadd.f32 %v1969, %v2242
    %2244 = vmatmul.bf16.gmra.mxu0 %v1889
    %v2245 = vpop.f32.mrf.mxu0
    %v2246 = vadd.f32 %v1969, %v2245
    %v2247 = vpop.f32.mrf.mxu0
    %v2248 = vadd.f32 %v1969, %v2247
    %2249 = vmatmul.bf16.gmra.mxu0 %v1891
    %v2250 = vpop.f32.mrf.mxu0
    %v2251 = vadd.f32 %v1969, %v2250
    %v2252 = vpop.f32.mrf.mxu0
    %v2253 = vadd.f32 %v1969, %v2252
    %2254 = vmatmul.bf16.gmra.mxu0 %v1893
    %v2255 = vpop.f32.mrf.mxu0
    %v2256 = vadd.f32 %v1969, %v2255
    %v2257 = vpop.f32.mrf.mxu0
    %v2258 = vadd.f32 %v1969, %v2257
    %2259 = vmatmul.bf16.gmra.mxu0 %v1895
    %v2260 = vpop.f32.mrf.mxu0
    %v2261 = vadd.f32 %v1969, %v2260
    %v2262 = vpop.f32.mrf.mxu0
    %v2263 = vadd.f32 %v1969, %v2262
    %2264 = vmatmul.bf16.gmra.mxu0 %v1897
    %v2265 = vpop.f32.mrf.mxu0
    %v2266 = vadd.f32 %v1969, %v2265
    %v2267 = vpop.f32.mrf.mxu0
    %v2268 = vadd.f32 %v1969, %v2267
    %2269 = vmatmul.bf16.gmra.mxu0 %v1899
    %v2270 = vpop.f32.mrf.mxu0
    %v2271 = vadd.f32 %v1969, %v2270
    %v2272 = vpop.f32.mrf.mxu0
    %v2273 = vadd.f32 %v1969, %v2272
    %2274 = vmatmul.bf16.gmra.mxu0 %v1901
    %v2275 = vpop.f32.mrf.mxu0
    %v2276 = vadd.f32 %v1969, %v2275
    %v2277 = vpop.f32.mrf.mxu0
    %v2278 = vadd.f32 %v1969, %v2277
    %2279 = vdwg.mxu0
    %2280 = vmatpush.bf16.msra.mxu0 %v2180
    %2281 = vmatpush.bf16.msra.mxu0 %v2177
    %2282 = vmatpush.bf16.msra.mxu0 %v2174
    %2283 = vmatpush.bf16.msra.mxu0 %v2171
    %2284 = vmatpush.bf16.msra.mxu0 %v2168
    %2285 = vmatpush.bf16.msra.mxu0 %v2165
    %2286 = vmatpush.bf16.msra.mxu0 %v2162
    %2287 = vmatpush.bf16.msra.mxu0 %v2159
    %2288 = vmatmul.bf16.gmra.mxu0 %v1888
    %v2289 = vpop.f32.mrf.mxu0
    %v2290 = vadd.f32 %v2241, %v2289
    %v2291 = vpop.f32.mrf.mxu0
    %v2292 = vadd.f32 %v2243, %v2291
    %2293 = vmatmul.bf16.gmra.mxu0 %v1890
    %v2294 = vpop.f32.mrf.mxu0
    %v2295 = vadd.f32 %v2246, %v2294
    %v2296 = vpop.f32.mrf.mxu0
    %v2297 = vadd.f32 %v2248, %v2296
    %2298 = vmatmul.bf16.gmra.mxu0 %v1892
    %v2299 = vpop.f32.mrf.mxu0
    %v2300 = vadd.f32 %v2251, %v2299
    %v2301 = vpop.f32.mrf.mxu0
    %v2302 = vadd.f32 %v2253, %v2301
    %2303 = vmatmul.bf16.gmra.mxu0 %v1894
    %v2304 = vpop.f32.mrf.mxu0
    %v2305 = vadd.f32 %v2256, %v2304
    %v2306 = vpop.f32.mrf.mxu0
    %v2307 = vadd.f32 %v2258, %v2306
    %2308 = vmatmul.bf16.gmra.mxu0 %v1896
    %v2309 = vpop.f32.mrf.mxu0
    %v2310 = vadd.f32 %v2261, %v2309
    %v2311 = vpop.f32.mrf.mxu0
    %v2312 = vadd.f32 %v2263, %v2311
    %2313 = vmatmul.bf16.gmra.mxu0 %v1898
    %v2314 = vpop.f32.mrf.mxu0
    %v2315 = vadd.f32 %v2266, %v2314
    %v2316 = vpop.f32.mrf.mxu0
    %v2317 = vadd.f32 %v2268, %v2316
    %2318 = vmatmul.bf16.gmra.mxu0 %v1900
    %v2319 = vpop.f32.mrf.mxu0
    %v2320 = vadd.f32 %v2271, %v2319
    %v2321 = vpop.f32.mrf.mxu0
    %v2322 = vadd.f32 %v2273, %v2321
    %2323 = vmatmul.bf16.gmra.mxu0 %v1902
    %v2324 = vpop.f32.mrf.mxu0
    %v2325 = vadd.f32 %v2276, %v2324
    %v2326 = vpop.f32.mrf.mxu0
    %v2327 = vadd.f32 %v2278, %v2326
    %2328 = vdwg.mxu0
    %2329 = vmatpush.bf16.msra.mxu0 %v2157
    %2330 = vmatpush.bf16.msra.mxu0 %v2154
    %2331 = vmatpush.bf16.msra.mxu0 %v2151
    %2332 = vmatpush.bf16.msra.mxu0 %v2148
    %2333 = vmatpush.bf16.msra.mxu0 %v2145
    %2334 = vmatpush.bf16.msra.mxu0 %v2142
    %2335 = vmatpush.bf16.msra.mxu0 %v2139
    %2336 = vmatpush.bf16.msra.mxu0 %v2136
    %2337 = vmatmul.bf16.gmra.mxu0 %v1887
    %v2338 = vpop.f32.mrf.mxu0
    %v2339 = vadd.f32 %v1970, %v2338
    %v2340 = vpop.f32.mrf.mxu0
    %v2341 = vadd.f32 %v1970, %v2340
    %2342 = vmatmul.bf16.gmra.mxu0 %v1889
    %v2343 = vpop.f32.mrf.mxu0
    %v2344 = vadd.f32 %v1970, %v2343
    %v2345 = vpop.f32.mrf.mxu0
    %v2346 = vadd.f32 %v1970, %v2345
    %2347 = vmatmul.bf16.gmra.mxu0 %v1891
    %v2348 = vpop.f32.mrf.mxu0
    %v2349 = vadd.f32 %v1970, %v2348
    %v2350 = vpop.f32.mrf.mxu0
    %v2351 = vadd.f32 %v1970, %v2350
    %2352 = vmatmul.bf16.gmra.mxu0 %v1893
    %v2353 = vpop.f32.mrf.mxu0
    %v2354 = vadd.f32 %v1970, %v2353
    %v2355 = vpop.f32.mrf.mxu0
    %v2356 = vadd.f32 %v1970, %v2355
    %2357 = vmatmul.bf16.gmra.mxu0 %v1895
    %v2358 = vpop.f32.mrf.mxu0
    %v2359 = vadd.f32 %v1970, %v2358
    %v2360 = vpop.f32.mrf.mxu0
    %v2361 = vadd.f32 %v1970, %v2360
    %2362 = vmatmul.bf16.gmra.mxu0 %v1897
    %v2363 = vpop.f32.mrf.mxu0
    %v2364 = vadd.f32 %v1970, %v2363
    %v2365 = vpop.f32.mrf.mxu0
    %v2366 = vadd.f32 %v1970, %v2365
    %2367 = vmatmul.bf16.gmra.mxu0 %v1899
    %v2368 = vpop.f32.mrf.mxu0
    %v2369 = vadd.f32 %v1970, %v2368
    %v2370 = vpop.f32.mrf.mxu0
    %v2371 = vadd.f32 %v1970, %v2370
    %2372 = vmatmul.bf16.gmra.mxu0 %v1901
    %v2373 = vpop.f32.mrf.mxu0
    %v2374 = vadd.f32 %v1970, %v2373
    %v2375 = vpop.f32.mrf.mxu0
    %v2376 = vadd.f32 %v1970, %v2375
    %2377 = vdwg.mxu0
    %2378 = vmatpush.bf16.msra.mxu0 %v2181
    %2379 = vmatpush.bf16.msra.mxu0 %v2178
    %2380 = vmatpush.bf16.msra.mxu0 %v2175
    %2381 = vmatpush.bf16.msra.mxu0 %v2172
    %2382 = vmatpush.bf16.msra.mxu0 %v2169
    %2383 = vmatpush.bf16.msra.mxu0 %v2166
    %2384 = vmatpush.bf16.msra.mxu0 %v2163
    %2385 = vmatpush.bf16.msra.mxu0 %v2160
    %2386 = vmatmul.bf16.gmra.mxu0 %v1888
    %v2387 = vpop.f32.mrf.mxu0
    %v2388 = vadd.f32 %v2339, %v2387
    %v2389 = vpop.f32.mrf.mxu0
    %v2390 = vadd.f32 %v2341, %v2389
    %2391 = vmatmul.bf16.gmra.mxu0 %v1890
    %v2392 = vpop.f32.mrf.mxu0
    %v2393 = vadd.f32 %v2344, %v2392
    %v2394 = vpop.f32.mrf.mxu0
    %v2395 = vadd.f32 %v2346, %v2394
    %2396 = vmatmul.bf16.gmra.mxu0 %v1892
    %v2397 = vpop.f32.mrf.mxu0
    %v2398 = vadd.f32 %v2349, %v2397
    %v2399 = vpop.f32.mrf.mxu0
    %v2400 = vadd.f32 %v2351, %v2399
    %2401 = vmatmul.bf16.gmra.mxu0 %v1894
    %v2402 = vpop.f32.mrf.mxu0
    %v2403 = vadd.f32 %v2354, %v2402
    %v2404 = vpop.f32.mrf.mxu0
    %v2405 = vadd.f32 %v2356, %v2404
    %2406 = vmatmul.bf16.gmra.mxu0 %v1896
    %v2407 = vpop.f32.mrf.mxu0
    %v2408 = vadd.f32 %v2359, %v2407
    %v2409 = vpop.f32.mrf.mxu0
    %v2410 = vadd.f32 %v2361, %v2409
    %2411 = vmatmul.bf16.gmra.mxu0 %v1898
    %v2412 = vpop.f32.mrf.mxu0
    %v2413 = vadd.f32 %v2364, %v2412
    %v2414 = vpop.f32.mrf.mxu0
    %v2415 = vadd.f32 %v2366, %v2414
    %2416 = vmatmul.bf16.gmra.mxu0 %v1900
    %v2417 = vpop.f32.mrf.mxu0
    %v2418 = vadd.f32 %v2369, %v2417
    %v2419 = vpop.f32.mrf.mxu0
    %v2420 = vadd.f32 %v2371, %v2419
    %2421 = vmatmul.bf16.gmra.mxu0 %v1902
    %v2422 = vpop.f32.mrf.mxu0
    %v2423 = vadd.f32 %v2374, %v2422
    %v2424 = vpop.f32.mrf.mxu0
    %v2425 = vadd.f32 %v2376, %v2424
    %2426 = vdwg.mxu0
    %2427 = vmatpush.bf16.msra.mxu0 %v2158
    %2428 = vmatpush.bf16.msra.mxu0 %v2155
    %2429 = vmatpush.bf16.msra.mxu0 %v2152
    %2430 = vmatpush.bf16.msra.mxu0 %v2149
    %2431 = vmatpush.bf16.msra.mxu0 %v2146
    %2432 = vmatpush.bf16.msra.mxu0 %v2143
    %2433 = vmatpush.bf16.msra.mxu0 %v2140
    %2434 = vmatpush.bf16.msra.mxu0 %v2137
    %2435 = vmatmul.bf16.gmra.mxu0 %v1887
    %v2436 = vpop.f32.mrf.mxu0
    %v2437 = vadd.f32 %v1971, %v2436
    %v2438 = vpop.f32.mrf.mxu0
    %v2439 = vadd.f32 %v1971, %v2438
    %2440 = vmatmul.bf16.gmra.mxu0 %v1889
    %v2441 = vpop.f32.mrf.mxu0
    %v2442 = vadd.f32 %v1971, %v2441
    %v2443 = vpop.f32.mrf.mxu0
    %v2444 = vadd.f32 %v1971, %v2443
    %2445 = vmatmul.bf16.gmra.mxu0 %v1891
    %v2446 = vpop.f32.mrf.mxu0
    %v2447 = vadd.f32 %v1971, %v2446
    %v2448 = vpop.f32.mrf.mxu0
    %v2449 = vadd.f32 %v1971, %v2448
    %2450 = vmatmul.bf16.gmra.mxu0 %v1893
    %v2451 = vpop.f32.mrf.mxu0
    %v2452 = vadd.f32 %v1971, %v2451
    %v2453 = vpop.f32.mrf.mxu0
    %v2454 = vadd.f32 %v1971, %v2453
    %2455 = vmatmul.bf16.gmra.mxu0 %v1895
    %v2456 = vpop.f32.mrf.mxu0
    %v2457 = vadd.f32 %v1971, %v2456
    %v2458 = vpop.f32.mrf.mxu0
    %v2459 = vadd.f32 %v1971, %v2458
    %2460 = vmatmul.bf16.gmra.mxu0 %v1897
    %v2461 = vpop.f32.mrf.mxu0
    %v2462 = vadd.f32 %v1971, %v2461
    %v2463 = vpop.f32.mrf.mxu0
    %v2464 = vadd.f32 %v1971, %v2463
    %2465 = vmatmul.bf16.gmra.mxu0 %v1899
    %v2466 = vpop.f32.mrf.mxu0
    %v2467 = vadd.f32 %v1971, %v2466
    %v2468 = vpop.f32.mrf.mxu0
    %v2469 = vadd.f32 %v1971, %v2468
    %2470 = vmatmul.bf16.gmra.mxu0 %v1901
    %v2471 = vpop.f32.mrf.mxu0
    %v2472 = vadd.f32 %v1971, %v2471
    %v2473 = vpop.f32.mrf.mxu0
    %v2474 = vadd.f32 %v1971, %v2473
    %2475 = vdwg.mxu0
    %2476 = vmatpush.bf16.msra.mxu0 %v2182
    %2477 = vmatpush.bf16.msra.mxu0 %v2179
    %2478 = vmatpush.bf16.msra.mxu0 %v2176
    %2479 = vmatpush.bf16.msra.mxu0 %v2173
    %2480 = vmatpush.bf16.msra.mxu0 %v2170
    %2481 = vmatpush.bf16.msra.mxu0 %v2167
    %2482 = vmatpush.bf16.msra.mxu0 %v2164
    %2483 = vmatpush.bf16.msra.mxu0 %v2161
    %2484 = vmatmul.bf16.gmra.mxu0 %v1888
    %v2485 = vpop.f32.mrf.mxu0
    %v2486 = vadd.f32 %v2437, %v2485
    %v2487 = vpop.f32.mrf.mxu0
    %v2488 = vadd.f32 %v2439, %v2487
    %2489 = vmatmul.bf16.gmra.mxu0 %v1890
    %v2490 = vpop.f32.mrf.mxu0
    %v2491 = vadd.f32 %v2442, %v2490
    %v2492 = vpop.f32.mrf.mxu0
    %v2493 = vadd.f32 %v2444, %v2492
    %2494 = vmatmul.bf16.gmra.mxu0 %v1892
    %v2495 = vpop.f32.mrf.mxu0
    %v2496 = vadd.f32 %v2447, %v2495
    %v2497 = vpop.f32.mrf.mxu0
    %v2498 = vadd.f32 %v2449, %v2497
    %2499 = vmatmul.bf16.gmra.mxu0 %v1894
    %v2500 = vpop.f32.mrf.mxu0
    %v2501 = vadd.f32 %v2452, %v2500
    %v2502 = vpop.f32.mrf.mxu0
    %v2503 = vadd.f32 %v2454, %v2502
    %2504 = vmatmul.bf16.gmra.mxu0 %v1896
    %v2505 = vpop.f32.mrf.mxu0
    %v2506 = vadd.f32 %v2457, %v2505
    %v2507 = vpop.f32.mrf.mxu0
    %v2508 = vadd.f32 %v2459, %v2507
    %2509 = vmatmul.bf16.gmra.mxu0 %v1898
    %v2510 = vpop.f32.mrf.mxu0
    %v2511 = vadd.f32 %v2462, %v2510
    %v2512 = vpop.f32.mrf.mxu0
    %v2513 = vadd.f32 %v2464, %v2512
    %2514 = vmatmul.bf16.gmra.mxu0 %v1900
    %v2515 = vpop.f32.mrf.mxu0
    %v2516 = vadd.f32 %v2467, %v2515
    %v2517 = vpop.f32.mrf.mxu0
    %v2518 = vadd.f32 %v2469, %v2517
    %2519 = vmatmul.bf16.gmra.mxu0 %v1902
    %v2520 = vpop.f32.mrf.mxu0
    %v2521 = vadd.f32 %v2472, %v2520
    %v2522 = vpop.f32.mrf.mxu0
    %v2523 = vadd.f32 %v2474, %v2522
    %2524 = vdwg.mxu0
    %v2525 = vpack.c.bf16 %v2388, %v2290
    %v2526 = vpack.c.bf16 %v2486, %v2486
    %v2527 = vpack.c.bf16 %v2390, %v2292
    %v2528 = vpack.c.bf16 %v2488, %v2488
    %v2529 = vpack.c.bf16 %v2393, %v2295
    %v2530 = vpack.c.bf16 %v2491, %v2491
    %v2531 = vpack.c.bf16 %v2395, %v2297
    %v2532 = vpack.c.bf16 %v2493, %v2493
    %v2533 = vpack.c.bf16 %v2398, %v2300
    %v2534 = vpack.c.bf16 %v2496, %v2496
    %v2535 = vpack.c.bf16 %v2400, %v2302
    %v2536 = vpack.c.bf16 %v2498, %v2498
    %v2537 = vpack.c.bf16 %v2403, %v2305
    %v2538 = vpack.c.bf16 %v2501, %v2501
    %v2539 = vpack.c.bf16 %v2405, %v2307
    %v2540 = vpack.c.bf16 %v2503, %v2503
    %v2541 = vpack.c.bf16 %v2408, %v2310
    %v2542 = vpack.c.bf16 %v2506, %v2506
    %v2543 = vpack.c.bf16 %v2410, %v2312
    %v2544 = vpack.c.bf16 %v2508, %v2508
    %v2545 = vpack.c.bf16 %v2413, %v2315
    %v2546 = vpack.c.bf16 %v2511, %v2511
    %v2547 = vpack.c.bf16 %v2415, %v2317
    %v2548 = vpack.c.bf16 %v2513, %v2513
    %v2549 = vpack.c.bf16 %v2418, %v2320
    %v2550 = vpack.c.bf16 %v2516, %v2516
    %v2551 = vpack.c.bf16 %v2420, %v2322
    %v2552 = vpack.c.bf16 %v2518, %v2518
    %v2553 = vpack.c.bf16 %v2423, %v2325
    %v2554 = vpack.c.bf16 %v2521, %v2521
    %v2555 = vpack.c.bf16 %v2425, %v2327
    %v2556 = vpack.c.bf16 %v2523, %v2523
    %2557 = vst [vmem:[#allocation19] sm:$0xff] %v2525
    %2558 = vst [vmem:[#allocation19 + $0x8] sm:$0xf] %v2526
    %2559 = vst [vmem:[#allocation19 + $0xc] sm:$0xff] %v2527
    %2560 = vst [vmem:[#allocation19 + $0x14] sm:$0xf] %v2528
    %2561 = vst [vmem:[#allocation19 + $0x18] sm:$0xff] %v2529
    %2562 = vst [vmem:[#allocation19 + $0x20] sm:$0xf] %v2530
    %2563 = vst [vmem:[#allocation19 + $0x24] sm:$0xff] %v2531
    %2564 = vst [vmem:[#allocation19 + $0x2c] sm:$0xf] %v2532
    %2565 = vst [vmem:[#allocation19 + $0x30] sm:$0xff] %v2533
    %2566 = vst [vmem:[#allocation19 + $0x38] sm:$0xf] %v2534
    %2567 = vst [vmem:[#allocation19 + $0x3c] sm:$0xff] %v2535
    %2568 = vst [vmem:[#allocation19 + $0x44] sm:$0xf] %v2536
    %2569 = vst [vmem:[#allocation19 + $0x48] sm:$0xff] %v2537
    %2570 = vst [vmem:[#allocation19 + $0x50] sm:$0xf] %v2538
    %2571 = vst [vmem:[#allocation19 + $0x54] sm:$0xff] %v2539
    %2572 = vst [vmem:[#allocation19 + $0x5c] sm:$0xf] %v2540
    %2573 = vst [vmem:[#allocation19 + $0x60] sm:$0xff] %v2541
    %2574 = vst [vmem:[#allocation19 + $0x68] sm:$0xf] %v2542
    %2575 = vst [vmem:[#allocation19 + $0x6c] sm:$0xff] %v2543
    %2576 = vst [vmem:[#allocation19 + $0x74] sm:$0xf] %v2544
    %2577 = vst [vmem:[#allocation19 + $0x78] sm:$0xff] %v2545
    %2578 = vst [vmem:[#allocation19 + $0x80] sm:$0xf] %v2546
    %2579 = vst [vmem:[#allocation19 + $0x84] sm:$0xff] %v2547
    %2580 = vst [vmem:[#allocation19 + $0x8c] sm:$0xf] %v2548
    %2581 = vst [vmem:[#allocation19 + $0x90] sm:$0xff] %v2549
    %2582 = vst [vmem:[#allocation19 + $0x98] sm:$0xf] %v2550
    %2583 = vst [vmem:[#allocation19 + $0x9c] sm:$0xff] %v2551
    %2584 = vst [vmem:[#allocation19 + $0xa4] sm:$0xf] %v2552
    %2585 = vst [vmem:[#allocation19 + $0xa8] sm:$0xff] %v2553
    %2586 = vst [vmem:[#allocation19 + $0xb0] sm:$0xf] %v2554
    %2587 = vst [vmem:[#allocation19 + $0xb4] sm:$0xff] %v2555
    %2588 = vst [vmem:[#allocation19 + $0xbc] sm:$0xf] %v2556
    // Predicated region
    $region94: #{tpu_custom_call.1} parent=1 // pred_check
      _
    $region95: #{tpu_custom_call.1} parent=1 // pred_check_branch
      %2590 = sbr.rel (0) target = $region97
    $region96: #{tpu_custom_call.1} parent=1 // pred_region
      %2592 = vsyncadd [#allocation4], 0
      %s2593 = sshll.u32 [#allocation19], 4
      %s2594 = int_to_ptr.vmem [resolvable:$true] %s2593
      %s2595 = sshll.u32 %s13, 4
      %s2596 = int_to_ptr.hbm [resolvable:$true] %s2595
      %2601 = dma.vmem_to_hbm [thread:$0]  %s2594, 3072, %s2596, [#allocation4], 192, 192, 12
    $region97: #{tpu_custom_call.1} parent=1 // pred_fallthru
      _
    // Predicated region
    $region98: #{tpu_custom_call.1} parent=1 // pred_check
      _
    $region99: #{tpu_custom_call.1} parent=1 // pred_check_branch
      %2603 = sbr.rel (0) target = $region101
    $region100: #{tpu_custom_call.1} parent=1 // pred_region
      %2605 = dma.done [#allocation4], 3072
    $region101: #{tpu_custom_call.1} parent=1 // pred_fallthru
      _
    %2606 = vsyncpa [#allocation3], 1
    %2607 = vsyncpa [#allocation6], 1
    %2608 = vsyncpa [#allocation9], 1
    %2609 = vsyncpa [#allocation12], 1
    %2610 = vsyncpa [#allocation15], 1
    %2611 = vsyncpa [#allocation18], 1
    %2612 = vsyncpa [#allocation4], 1

</llo_original>
